<compile_context>
chip_gen: v6e
topology: v6e:2x2x1
jax: 0.10.0
libtpu: 0.0.40
codegen_flags: <defaults>
</compile_context>

<pallas_src>
import functools

import jax
import jax.numpy as jnp
from jax.experimental import pallas as pl
from jax.experimental.pallas import tpu as pltpu

LN_EPS = 1e-6  # LSTMCell4RNMT uses nn.LayerNorm((4, osize), eps=1e-6)


def _round_up(x, m):
    return (x + m - 1) // m * m


def _decoder_layer_kernel(inp_ref, attn_ref, wxi_ref, wxa_ref, wh_ref,
                          bias_ref, lnw_ref, lnb_ref, ih_ref, ic_ref,
                          out_ref, gx_ref, hx_ref, cx_ref,
                          *, batch, residual, unroll):
    """One T-chunk of the RNMT decoder recurrence.

    inp_ref/attn_ref/out_ref : (t_chunk*batch, H)  time-major, batch flattened
    wxi/wxa/wh               : (H, 4H)             split Linear(3H->4H) weight
    bias/lnw/lnb             : (1, 4H)
    ih/ic                    : (1, H)              learned initial state
    gx_ref                   : (t_chunk*batch, 4H) VMEM scratch (chunk gates)
    hx_ref/cx_ref            : (batch, H)          VMEM scratch carried across
                                                   grid steps (t-chunks)
    """
    rows, H = inp_ref.shape
    t_chunk = rows // batch
    G = 4 * H

    # (Re)initialize the carried state at the start of the sequence; it then
    # persists in VMEM scratch across the remaining t-chunks.
    @pl.when(pl.program_id(0) == 0)
    def _():
        hx_ref[...] = jnp.broadcast_to(ih_ref[...], (batch, H))
        cx_ref[...] = jnp.broadcast_to(ic_ref[...], (batch, H))

    # Fused input projection for the whole chunk: one big MXU matmul per
    # streamed input (no serial dependency, gates never touch HBM).
    gx_ref[...] = (
        jnp.dot(inp_ref[...], wxi_ref[...], preferred_element_type=jnp.float32)
        + jnp.dot(attn_ref[...], wxa_ref[...], preferred_element_type=jnp.float32)
        + bias_ref[...])

    # Loop invariants.  LN affine params / gate mask stay (1, G) and broadcast
    # along sublanes at their use sites (no (B, G) materialization).
    wh = wh_ref[...]
    lnw = lnw_ref[...]
    lnb = lnb_ref[...]
    sig_mask = jax.lax.broadcasted_iota(jnp.int32, (1, G), 1) < 3 * H
    inv_g = jnp.float32(1.0 / G)

    def body(t, carry):
        hx, cx = carry
        row = pl.multiple_of(t * batch, 8)
        # Only the recurrent third of the projection is on the serial path.
        g = gx_ref[pl.ds(row, batch), :] + jnp.dot(
            hx, wh, preferred_element_type=jnp.float32)

        # Joint LayerNorm over all 4H gate features (nn.LayerNorm((4, H))).
        # Single-pass stats: the two cross-lane reductions are independent.
        mean = jnp.sum(g, axis=-1, keepdims=True) * inv_g
        ex2 = jnp.sum(g * g, axis=-1, keepdims=True) * inv_g
        var = ex2 - mean * mean
        gn = (g - mean) * jax.lax.rsqrt(var + LN_EPS) * lnw + lnb

        # One full-width EUP pass: tanh(x) = 2*sigmoid(2x) - 1.
        s = jax.nn.sigmoid(jnp.where(sig_mask, gn, 2.0 * gn))
        act = jnp.where(sig_mask, s, 2.0 * s - 1.0)

        ig = act[:, 0 * H:1 * H]
        fg = act[:, 1 * H:2 * H]
        og = act[:, 2 * H:3 * H]
        hidden = act[:, 3 * H:4 * H]

        cx_new = fg * cx + ig * hidden
        hx_new = og * cx_new          # LSTMCell4RNMT: no tanh on the cell state

        if residual:
            out_ref[pl.ds(row, batch), :] = hx_new + inp_ref[pl.ds(row, batch), :]
        else:
            out_ref[pl.ds(row, batch), :] = hx_new
        # TODO(synk): lane-dense stores (pack k timesteps into one (B, k*H)
        # write) would help when H < 128; production H >= 128 makes this moot.
        return hx_new, cx_new

    hx_fin, cx_fin = jax.lax.fori_loop(0, t_chunk, body,
                                       (hx_ref[...], cx_ref[...]),
                                       unroll=unroll)
    hx_ref[...] = hx_fin
    cx_ref[...] = cx_fin


@functools.partial(jax.jit, static_argnames=("residual",))
def decoder_layer_forward(inputo, attn, w_t, bias, ln_w, ln_b,
                          init_hx, init_cx, residual=True):
    """states=None path of DecoderLayer.forward (full-sequence recurrence)."""
    B, T, H = inputo.shape
    G = 4 * H

    # Split the Linear(3H -> 4H) weight (given transposed, shape (3H, 4H)):
    # rows [0,H) multiply inputo, [H,2H) multiply attn, [2H,3H) multiply hx.
    w_xi = w_t[0 * H:1 * H]
    w_xa = w_t[1 * H:2 * H]
    w_h = w_t[2 * H:3 * H]

    # Time-major streamed inputs (cheaper than transposing any 4H-wide tensor;
    # the gate tensor never exists in HBM since the projection is fused).
    inp_tm = jnp.transpose(inputo, (1, 0, 2))                 # (T, B, H)
    attn_tm = jnp.transpose(attn, (1, 0, 2))

    # Pad batch to a full sublane multiple.
    Bp = max(8, _round_up(B, 8))
    if Bp != B:
        pad = ((0, 0), (0, Bp - B), (0, 0))
        inp_tm = jnp.pad(inp_tm, pad)
        attn_tm = jnp.pad(attn_tm, pad)

    # --- T-chunk sizing: keep the per-chunk VMEM footprint modest on every
    # generation (v7x: 64 MiB physical / 32 MiB default scoped). ---
    budget = 20 * 2**20
    # streamed in/attn/out tiles (double-buffered) + gates scratch + matmul temp
    per_t = 4 * Bp * (2 * 3 * H + 8 * H)                      # bytes per timestep
    weight_bytes = 4 * 2 * (3 * H * G + 3 * G + 2 * H)
    tc = int(max(1, min(T, max(budget - weight_bytes, per_t) // per_t)))
    Tp = _round_up(T, tc)
    if Tp != T:
        pad = ((0, Tp - T), (0, 0), (0, 0))
        inp_tm = jnp.pad(inp_tm, pad)
        attn_tm = jnp.pad(attn_tm, pad)
    nt = Tp // tc

    # Flatten (T, B) -> rows so everything in the kernel is plain 2D.
    inp2d = inp_tm.reshape(Tp * Bp, H)
    attn2d = attn_tm.reshape(Tp * Bp, H)
    rows = tc * Bp

    unroll = int(max(1, min(8, tc)))
    vmem_limit = int(min(48 * 2**20,
                         max(16 * 2**20, 2 * (weight_bytes + per_t * tc))))

    kernel = functools.partial(_decoder_layer_kernel, batch=Bp,
                               residual=residual, unroll=unroll)
    const2 = lambda t: (0, 0)

    # TODO(synk): on v7x (2 TensorCores) add a leading "parallel" batch-chunk
    # grid axis (with per-chunk hx/cx scratch) to shard across cores; kept
    # single-core here since the extra axis is pure overhead on v5e/v6e.
    out2d = pl.pallas_call(
        kernel,
        out_shape=jax.ShapeDtypeStruct((Tp * Bp, H), jnp.float32),
        grid=(nt,),
        in_specs=[
            pl.BlockSpec((rows, H), lambda t: (t, 0)),        # inputo chunk
            pl.BlockSpec((rows, H), lambda t: (t, 0)),        # attn chunk
            pl.BlockSpec((H, G), const2),                     # W_xi
            pl.BlockSpec((H, G), const2),                     # W_xa
            pl.BlockSpec((H, G), const2),                     # W_h
            pl.BlockSpec((1, G), const2),                     # bias
            pl.BlockSpec((1, G), const2),                     # ln_w
            pl.BlockSpec((1, G), const2),                     # ln_b
            pl.BlockSpec((1, H), const2),                     # init_hx
            pl.BlockSpec((1, H), const2),                     # init_cx
        ],
        out_specs=pl.BlockSpec((rows, H), lambda t: (t, 0)),
        scratch_shapes=[
            pltpu.VMEM((rows, G), jnp.float32),               # per-chunk gates
            pltpu.VMEM((Bp, H), jnp.float32),                 # hx carry
            pltpu.VMEM((Bp, H), jnp.float32),                 # cx carry
        ],
        compiler_params=pltpu.CompilerParams(
            dimension_semantics=("arbitrary",),               # sequential carry
            vmem_limit_bytes=vmem_limit),
    )(inp2d, attn2d, w_xi, w_xa, w_h, bias, ln_w, ln_b, init_hx, init_cx)

    out_tm = out2d.reshape(Tp, Bp, H)
    return jnp.transpose(out_tm[:T, :B, :], (1, 0, 2))        # back to (B, T, H)


def _reference(inputo, attn, w_t, bias, ln_w, ln_b, init_hx, init_cx,
               residual=True):
    """Pure-JAX reference replicating the PyTorch semantics."""
    B, T, H = inputo.shape
    x = jnp.concatenate([inputo, attn], axis=-1)              # (B, T, 2H)

    def step(carry, xt):
        hx, cx = carry
        inp = jnp.concatenate([xt, hx], axis=-1)
        g = inp @ w_t + bias
        mean = jnp.mean(g, axis=-1, keepdims=True)
        var = jnp.mean((g - mean) ** 2, axis=-1, keepdims=True)
        gn = (g - mean) * jax.lax.rsqrt(var + LN_EPS) * ln_w + ln_b
        ig = jax.nn.sigmoid(gn[:, 0 * H:1 * H])
        fg = jax.nn.sigmoid(gn[:, 1 * H:2 * H])
        og = jax.nn.sigmoid(gn[:, 2 * H:3 * H])
        hidden = jnp.tanh(gn[:, 3 * H:4 * H])
        cx = fg * cx + ig * hidden
        hx = og * cx
        return (hx, cx), hx

    hx0 = jnp.broadcast_to(init_hx, (B, H))
    cx0 = jnp.broadcast_to(init_cx, (B, H))
    _, outs = jax.lax.scan(step, (hx0, cx0), jnp.transpose(x, (1, 0, 2)))
    outs = jnp.transpose(outs, (1, 0, 2))
    return outs + inputo if residual else outs


if __name__ == "__main__":
    # Sizes: isize = osize = H; DecoderLayer(isize, osize) => LSTMCell4RNMT(2H, H)
    B, T, H = 4, 8, 32

    key = jax.random.PRNGKey(0)
    k_in, k_at, k_w, k_b = jax.random.split(key, 4)

    inputo = jax.random.normal(k_in, (B, T, H), dtype=jnp.float32)
    attn = jax.random.normal(k_at, (B, T, H), dtype=jnp.float32)

    # LSTMCell4RNMT parameters: Linear(3H -> 4H), LayerNorm((4,H)) flattened to 4H.
    w_t = (jax.random.normal(k_w, (3 * H, 4 * H), dtype=jnp.float32)
           * (1.0 / jnp.sqrt(3.0 * H)))                       # W^T for x @ W^T
    bias = jax.random.normal(k_b, (1, 4 * H), dtype=jnp.float32) * 0.02
    ln_w = jnp.ones((1, 4 * H), dtype=jnp.float32)            # PyTorch LN default init
    ln_b = jnp.zeros((1, 4 * H), dtype=jnp.float32)
    init_hx = jnp.zeros((1, H), dtype=jnp.float32)            # nn.Parameter(zeros(1, osize))
    init_cx = jnp.zeros((1, H), dtype=jnp.float32)

    out = decoder_layer_forward(inputo, attn, w_t, bias, ln_w, ln_b,
                                init_hx, init_cx, residual=True)
    out = jax.block_until_ready(out)
    ref = _reference(inputo, attn, w_t, bias, ln_w, ln_b, init_hx, init_cx, True)
    assert out.shape == (B, T, H)
    assert jnp.allclose(out, ref, atol=2e-4, rtol=2e-4), "mismatch (residual=True)"

    out_nr = decoder_layer_forward(inputo, attn, w_t, bias, ln_w, ln_b,
                                   init_hx, init_cx, residual=False)
    out_nr = jax.block_until_ready(out_nr)
    ref_nr = _reference(inputo, attn, w_t, bias, ln_w, ln_b,
                        init_hx, init_cx, False)
    assert jnp.allclose(out_nr, ref_nr, atol=2e-4, rtol=2e-4), "mismatch (residual=False)"

    # TODO(synk): incremental-decode path (states != None) is a T=1 special case
    # of the same cell; reuse this kernel with T=1 / nt=1 if needed.
    print("KERNEL_OK")
</pallas_src>

<mosaic_0001>
module attributes {stable_mosaic.version = 11 : i64} {
  func.func @_decoder_layer_kernel(%arg0: i32, %arg1: memref<64x32xf32, #tpu.memory_space<vmem>>, %arg2: memref<64x32xf32, #tpu.memory_space<vmem>>, %arg3: memref<32x128xf32, #tpu.memory_space<vmem>>, %arg4: memref<32x128xf32, #tpu.memory_space<vmem>>, %arg5: memref<32x128xf32, #tpu.memory_space<vmem>>, %arg6: memref<1x128xf32, #tpu.memory_space<vmem>>, %arg7: memref<1x128xf32, #tpu.memory_space<vmem>>, %arg8: memref<1x128xf32, #tpu.memory_space<vmem>>, %arg9: memref<1x32xf32, #tpu.memory_space<vmem>>, %arg10: memref<1x32xf32, #tpu.memory_space<vmem>>, %arg11: memref<64x32xf32, #tpu.memory_space<vmem>>, %arg12: memref<64x128xf32, #tpu.memory_space<vmem>>, %arg13: memref<8x32xf32, #tpu.memory_space<vmem>>, %arg14: memref<8x32xf32, #tpu.memory_space<vmem>>) attributes {dimension_semantics = [#tpu.dimension_semantics<arbitrary>], iteration_bounds = array<i64: 1>, scalar_prefetch = 0 : i64, scratch_operands = 3 : i64, tpu.core_type = #tpu.core_type<tc>, window_params = [{transform_indices = @transform_0, window_bounds = array<i64: 64, 32>}, {transform_indices = @transform_1, window_bounds = array<i64: 64, 32>}, {pipeline_mode = #tpu.pipeline_mode<synchronous>, transform_indices = @transform_2, window_bounds = array<i64: 32, 128>}, {pipeline_mode = #tpu.pipeline_mode<synchronous>, transform_indices = @transform_3, window_bounds = array<i64: 32, 128>}, {pipeline_mode = #tpu.pipeline_mode<synchronous>, transform_indices = @transform_4, window_bounds = array<i64: 32, 128>}, {pipeline_mode = #tpu.pipeline_mode<synchronous>, transform_indices = @transform_5, window_bounds = array<i64: 1, 128>}, {pipeline_mode = #tpu.pipeline_mode<synchronous>, transform_indices = @transform_6, window_bounds = array<i64: 1, 128>}, {pipeline_mode = #tpu.pipeline_mode<synchronous>, transform_indices = @transform_7, window_bounds = array<i64: 1, 128>}, {pipeline_mode = #tpu.pipeline_mode<synchronous>, transform_indices = @transform_8, window_bounds = array<i64: 1, 32>}, {pipeline_mode = #tpu.pipeline_mode<synchronous>, transform_indices = @transform_9, window_bounds = array<i64: 1, 32>}, {transform_indices = @transform_10, window_bounds = array<i64: 64, 32>}]} {
    %c0_i32 = arith.constant 0 : i32
    %0 = arith.cmpi eq, %arg0, %c0_i32 : i32
    %1 = arith.extui %0 : i1 to i32
    %c0_i32_0 = arith.constant 0 : i32
    %2 = arith.cmpi ne, %1, %c0_i32_0 : i32
    scf.if %2 {
      %c0_125 = arith.constant 0 : index
      %c0_126 = arith.constant 0 : index
      %488 = vector.load %arg9[%c0_125, %c0_126] : memref<1x32xf32, #tpu.memory_space<vmem>>, vector<1x32xf32>
      %489 = vector.shape_cast %488 : vector<1x32xf32> to vector<1x32xf32>
      %490 = vector.broadcast %489 : vector<1x32xf32> to vector<8x32xf32>
      %c0_127 = arith.constant 0 : index
      %c0_128 = arith.constant 0 : index
      %491 = vector.load %arg13[%c0_127, %c0_128] : memref<8x32xf32, #tpu.memory_space<vmem>>, vector<8x32xf32>
      tpu.vector_store %arg13[%c0_127, %c0_128], %490 {strides = array<i32>} : memref<8x32xf32, #tpu.memory_space<vmem>>, vector<8x32xf32>,
      %c0_129 = arith.constant 0 : index
      %c0_130 = arith.constant 0 : index
      %492 = vector.load %arg10[%c0_129, %c0_130] : memref<1x32xf32, #tpu.memory_space<vmem>>, vector<1x32xf32>
      %493 = vector.shape_cast %492 : vector<1x32xf32> to vector<1x32xf32>
      %494 = vector.broadcast %493 : vector<1x32xf32> to vector<8x32xf32>
      %c0_131 = arith.constant 0 : index
      %c0_132 = arith.constant 0 : index
      %495 = vector.load %arg14[%c0_131, %c0_132] : memref<8x32xf32, #tpu.memory_space<vmem>>, vector<8x32xf32>
      tpu.vector_store %arg14[%c0_131, %c0_132], %494 {strides = array<i32>} : memref<8x32xf32, #tpu.memory_space<vmem>>, vector<8x32xf32>,
    } else {
    }
    %c0 = arith.constant 0 : index
    %c0_1 = arith.constant 0 : index
    %3 = vector.load %arg1[%c0, %c0_1] : memref<64x32xf32, #tpu.memory_space<vmem>>, vector<64x32xf32>
    %c0_2 = arith.constant 0 : index
    %c0_3 = arith.constant 0 : index
    %4 = vector.load %arg3[%c0_2, %c0_3] : memref<32x128xf32, #tpu.memory_space<vmem>>, vector<32x128xf32>
    %cst = arith.constant dense<0.000000e+00> : vector<64x128xf32>
    %5 = tpu.matmul %3, %4, %cst {dimension_numbers = #tpu.dot_dimension_numbers<[1], [0], [0], [1], [0, 0, 1, 1], [], []>} : vector<64x32xf32>, vector<32x128xf32>, vector<64x128xf32> -> vector<64x128xf32>
    %c0_4 = arith.constant 0 : index
    %c0_5 = arith.constant 0 : index
    %6 = vector.load %arg2[%c0_4, %c0_5] : memref<64x32xf32, #tpu.memory_space<vmem>>, vector<64x32xf32>
    %c0_6 = arith.constant 0 : index
    %c0_7 = arith.constant 0 : index
    %7 = vector.load %arg4[%c0_6, %c0_7] : memref<32x128xf32, #tpu.memory_space<vmem>>, vector<32x128xf32>
    %cst_8 = arith.constant dense<0.000000e+00> : vector<64x128xf32>
    %8 = tpu.matmul %6, %7, %cst_8 {dimension_numbers = #tpu.dot_dimension_numbers<[1], [0], [0], [1], [0, 0, 1, 1], [], []>} : vector<64x32xf32>, vector<32x128xf32>, vector<64x128xf32> -> vector<64x128xf32>
    %9 = arith.addf %5, %8 : vector<64x128xf32>
    %c0_9 = arith.constant 0 : index
    %c0_10 = arith.constant 0 : index
    %10 = vector.load %arg6[%c0_9, %c0_10] : memref<1x128xf32, #tpu.memory_space<vmem>>, vector<1x128xf32>
    %11 = vector.broadcast %10 : vector<1x128xf32> to vector<64x128xf32>
    %12 = arith.addf %9, %11 : vector<64x128xf32>
    %c0_11 = arith.constant 0 : index
    %c0_12 = arith.constant 0 : index
    %13 = vector.load %arg12[%c0_11, %c0_12] : memref<64x128xf32, #tpu.memory_space<vmem>>, vector<64x128xf32>
    tpu.vector_store %arg12[%c0_11, %c0_12], %12 {strides = array<i32>} : memref<64x128xf32, #tpu.memory_space<vmem>>, vector<64x128xf32>,
    %c0_13 = arith.constant 0 : index
    %c0_14 = arith.constant 0 : index
    %14 = vector.load %arg5[%c0_13, %c0_14] : memref<32x128xf32, #tpu.memory_space<vmem>>, vector<32x128xf32>
    %c0_15 = arith.constant 0 : index
    %c0_16 = arith.constant 0 : index
    %15 = vector.load %arg7[%c0_15, %c0_16] : memref<1x128xf32, #tpu.memory_space<vmem>>, vector<1x128xf32>
    %c0_17 = arith.constant 0 : index
    %c0_18 = arith.constant 0 : index
    %16 = vector.load %arg8[%c0_17, %c0_18] : memref<1x128xf32, #tpu.memory_space<vmem>>, vector<1x128xf32>
    %17 = tpu.iota {dimensions = array<i32: 1>} : vector<1x128xi32>
    %c96_i32 = arith.constant 96 : i32
    %18 = vector.broadcast %c96_i32 : i32 to vector<1x128xi32>
    %19 = arith.cmpi slt, %17, %18 : vector<1x128xi32>
    %c0_19 = arith.constant 0 : index
    %c0_20 = arith.constant 0 : index
    %20 = vector.load %arg13[%c0_19, %c0_20] : memref<8x32xf32, #tpu.memory_space<vmem>>, vector<8x32xf32>
    %c0_21 = arith.constant 0 : index
    %c0_22 = arith.constant 0 : index
    %21 = vector.load %arg14[%c0_21, %c0_22] : memref<8x32xf32, #tpu.memory_space<vmem>>, vector<8x32xf32>
    %cst_23 = arith.constant 7.812500e-03 : f32
    %c0_i32_24 = arith.constant 0 : i32
    %c8_i32 = arith.constant 8 : i32
    %22 = arith.muli %c0_i32_24, %c8_i32 : i32
    %23 = tpu.assume_multiple %22, 8 : i32
    %24 = arith.index_cast %23 : i32 to index
    %c0_25 = arith.constant 0 : index
    %25 = vector.load %arg12[%24, %c0_25] : memref<64x128xf32, #tpu.memory_space<vmem>>, vector<8x128xf32>
    %cst_26 = arith.constant dense<0.000000e+00> : vector<8x128xf32>
    %26 = tpu.matmul %20, %14, %cst_26 {dimension_numbers = #tpu.dot_dimension_numbers<[1], [0], [0], [1], [0, 0, 1, 1], [], []>} : vector<8x32xf32>, vector<32x128xf32>, vector<8x128xf32> -> vector<8x128xf32>
    %27 = arith.addf %25, %26 : vector<8x128xf32>
    %cst_27 = arith.constant dense<0.000000e+00> : vector<8xf32>
    %28 = vector.multi_reduction <add>, %27, %cst_27 [1] : vector<8x128xf32> to vector<8xf32>
    %29 = vector.shape_cast %28 : vector<8xf32> to vector<8x1xf32>
    %30 = vector.broadcast %cst_23 : f32 to vector<8x1xf32>
    %31 = arith.mulf %29, %30 : vector<8x1xf32>
    %32 = arith.mulf %27, %27 : vector<8x128xf32>
    %cst_28 = arith.constant dense<0.000000e+00> : vector<8xf32>
    %33 = vector.multi_reduction <add>, %32, %cst_28 [1] : vector<8x128xf32> to vector<8xf32>
    %34 = vector.shape_cast %33 : vector<8xf32> to vector<8x1xf32>
    %35 = vector.broadcast %cst_23 : f32 to vector<8x1xf32>
    %36 = arith.mulf %34, %35 : vector<8x1xf32>
    %37 = arith.mulf %31, %31 : vector<8x1xf32>
    %38 = arith.subf %36, %37 : vector<8x1xf32>
    %39 = vector.broadcast %31 : vector<8x1xf32> to vector<8x128xf32>
    %40 = arith.subf %27, %39 : vector<8x128xf32>
    %cst_29 = arith.constant 9.99999997E-7 : f32
    %41 = vector.broadcast %cst_29 : f32 to vector<8x1xf32>
    %42 = arith.addf %38, %41 : vector<8x1xf32>
    %43 = math.rsqrt %42 : vector<8x1xf32>
    %44 = vector.broadcast %43 : vector<8x1xf32> to vector<8x128xf32>
    %45 = arith.mulf %40, %44 : vector<8x128xf32>
    %46 = vector.broadcast %15 : vector<1x128xf32> to vector<8x128xf32>
    %47 = arith.mulf %45, %46 : vector<8x128xf32>
    %48 = vector.broadcast %16 : vector<1x128xf32> to vector<8x128xf32>
    %49 = arith.addf %47, %48 : vector<8x128xf32>
    %cst_30 = arith.constant 2.000000e+00 : f32
    %50 = vector.broadcast %cst_30 : f32 to vector<8x128xf32>
    %51 = arith.mulf %50, %49 : vector<8x128xf32>
    %52 = vector.shape_cast %19 : vector<1x128xi1> to vector<1x128xi1>
    %53 = vector.broadcast %52 : vector<1x128xi1> to vector<8x128xi1>
    %54 = arith.select %53, %49, %51 : vector<8x128xi1>, vector<8x128xf32>
    %55 = arith.negf %54 : vector<8x128xf32>
    %56 = math.exp %55 : vector<8x128xf32>
    %cst_31 = arith.constant 1.000000e+00 : f32
    %57 = vector.broadcast %cst_31 : f32 to vector<8x128xf32>
    %58 = arith.addf %57, %56 : vector<8x128xf32>
    %59 = arith.divf %57, %58 : vector<8x128xf32>
    %cst_32 = arith.constant 2.000000e+00 : f32
    %60 = vector.broadcast %cst_32 : f32 to vector<8x128xf32>
    %61 = arith.mulf %60, %59 : vector<8x128xf32>
    %cst_33 = arith.constant 1.000000e+00 : f32
    %62 = vector.broadcast %cst_33 : f32 to vector<8x128xf32>
    %63 = arith.subf %61, %62 : vector<8x128xf32>
    %64 = vector.shape_cast %19 : vector<1x128xi1> to vector<1x128xi1>
    %65 = vector.broadcast %64 : vector<1x128xi1> to vector<8x128xi1>
    %66 = arith.select %65, %59, %63 : vector<8x128xi1>, vector<8x128xf32>
    %67 = vector.extract_strided_slice %66 {offsets = [0, 0], sizes = [8, 32], strides = [1, 1]} : vector<8x128xf32> to vector<8x32xf32>
    %68 = vector.extract_strided_slice %66 {offsets = [0, 32], sizes = [8, 32], strides = [1, 1]} : vector<8x128xf32> to vector<8x32xf32>
    %69 = vector.extract_strided_slice %66 {offsets = [0, 64], sizes = [8, 32], strides = [1, 1]} : vector<8x128xf32> to vector<8x32xf32>
    %70 = vector.extract_strided_slice %66 {offsets = [0, 96], sizes = [8, 32], strides = [1, 1]} : vector<8x128xf32> to vector<8x32xf32>
    %71 = arith.mulf %68, %21 : vector<8x32xf32>
    %72 = arith.mulf %67, %70 : vector<8x32xf32>
    %73 = arith.addf %71, %72 : vector<8x32xf32>
    %74 = arith.mulf %69, %73 : vector<8x32xf32>
    %75 = arith.index_cast %23 : i32 to index
    %c0_34 = arith.constant 0 : index
    %76 = vector.load %arg1[%75, %c0_34] : memref<64x32xf32, #tpu.memory_space<vmem>>, vector<8x32xf32>
    %77 = arith.addf %74, %76 : vector<8x32xf32>
    %78 = arith.index_cast %23 : i32 to index
    %c0_35 = arith.constant 0 : index
    %79 = vector.load %arg11[%78, %c0_35] : memref<64x32xf32, #tpu.memory_space<vmem>>, vector<8x32xf32>
    tpu.vector_store %arg11[%78, %c0_35], %77 {strides = array<i32>} : memref<64x32xf32, #tpu.memory_space<vmem>>, vector<8x32xf32>,
    %c1_i32 = arith.constant 1 : i32
    %c8_i32_36 = arith.constant 8 : i32
    %80 = arith.muli %c1_i32, %c8_i32_36 : i32
    %81 = tpu.assume_multiple %80, 8 : i32
    %82 = arith.index_cast %81 : i32 to index
    %c0_37 = arith.constant 0 : index
    %83 = vector.load %arg12[%82, %c0_37] : memref<64x128xf32, #tpu.memory_space<vmem>>, vector<8x128xf32>
    %cst_38 = arith.constant dense<0.000000e+00> : vector<8x128xf32>
    %84 = tpu.matmul %74, %14, %cst_38 {dimension_numbers = #tpu.dot_dimension_numbers<[1], [0], [0], [1], [0, 0, 1, 1], [], []>} : vector<8x32xf32>, vector<32x128xf32>, vector<8x128xf32> -> vector<8x128xf32>
    %85 = arith.addf %83, %84 : vector<8x128xf32>
    %cst_39 = arith.constant dense<0.000000e+00> : vector<8xf32>
    %86 = vector.multi_reduction <add>, %85, %cst_39 [1] : vector<8x128xf32> to vector<8xf32>
    %87 = vector.shape_cast %86 : vector<8xf32> to vector<8x1xf32>
    %88 = vector.broadcast %cst_23 : f32 to vector<8x1xf32>
    %89 = arith.mulf %87, %88 : vector<8x1xf32>
    %90 = arith.mulf %85, %85 : vector<8x128xf32>
    %cst_40 = arith.constant dense<0.000000e+00> : vector<8xf32>
    %91 = vector.multi_reduction <add>, %90, %cst_40 [1] : vector<8x128xf32> to vector<8xf32>
    %92 = vector.shape_cast %91 : vector<8xf32> to vector<8x1xf32>
    %93 = vector.broadcast %cst_23 : f32 to vector<8x1xf32>
    %94 = arith.mulf %92, %93 : vector<8x1xf32>
    %95 = arith.mulf %89, %89 : vector<8x1xf32>
    %96 = arith.subf %94, %95 : vector<8x1xf32>
    %97 = vector.broadcast %89 : vector<8x1xf32> to vector<8x128xf32>
    %98 = arith.subf %85, %97 : vector<8x128xf32>
    %cst_41 = arith.constant 9.99999997E-7 : f32
    %99 = vector.broadcast %cst_41 : f32 to vector<8x1xf32>
    %100 = arith.addf %96, %99 : vector<8x1xf32>
    %101 = math.rsqrt %100 : vector<8x1xf32>
    %102 = vector.broadcast %101 : vector<8x1xf32> to vector<8x128xf32>
    %103 = arith.mulf %98, %102 : vector<8x128xf32>
    %104 = vector.broadcast %15 : vector<1x128xf32> to vector<8x128xf32>
    %105 = arith.mulf %103, %104 : vector<8x128xf32>
    %106 = vector.broadcast %16 : vector<1x128xf32> to vector<8x128xf32>
    %107 = arith.addf %105, %106 : vector<8x128xf32>
    %cst_42 = arith.constant 2.000000e+00 : f32
    %108 = vector.broadcast %cst_42 : f32 to vector<8x128xf32>
    %109 = arith.mulf %108, %107 : vector<8x128xf32>
    %110 = vector.shape_cast %19 : vector<1x128xi1> to vector<1x128xi1>
    %111 = vector.broadcast %110 : vector<1x128xi1> to vector<8x128xi1>
    %112 = arith.select %111, %107, %109 : vector<8x128xi1>, vector<8x128xf32>
    %113 = arith.negf %112 : vector<8x128xf32>
    %114 = math.exp %113 : vector<8x128xf32>
    %cst_43 = arith.constant 1.000000e+00 : f32
    %115 = vector.broadcast %cst_43 : f32 to vector<8x128xf32>
    %116 = arith.addf %115, %114 : vector<8x128xf32>
    %117 = arith.divf %115, %116 : vector<8x128xf32>
    %cst_44 = arith.constant 2.000000e+00 : f32
    %118 = vector.broadcast %cst_44 : f32 to vector<8x128xf32>
    %119 = arith.mulf %118, %117 : vector<8x128xf32>
    %cst_45 = arith.constant 1.000000e+00 : f32
    %120 = vector.broadcast %cst_45 : f32 to vector<8x128xf32>
    %121 = arith.subf %119, %120 : vector<8x128xf32>
    %122 = vector.shape_cast %19 : vector<1x128xi1> to vector<1x128xi1>
    %123 = vector.broadcast %122 : vector<1x128xi1> to vector<8x128xi1>
    %124 = arith.select %123, %117, %121 : vector<8x128xi1>, vector<8x128xf32>
    %125 = vector.extract_strided_slice %124 {offsets = [0, 0], sizes = [8, 32], strides = [1, 1]} : vector<8x128xf32> to vector<8x32xf32>
    %126 = vector.extract_strided_slice %124 {offsets = [0, 32], sizes = [8, 32], strides = [1, 1]} : vector<8x128xf32> to vector<8x32xf32>
    %127 = vector.extract_strided_slice %124 {offsets = [0, 64], sizes = [8, 32], strides = [1, 1]} : vector<8x128xf32> to vector<8x32xf32>
    %128 = vector.extract_strided_slice %124 {offsets = [0, 96], sizes = [8, 32], strides = [1, 1]} : vector<8x128xf32> to vector<8x32xf32>
    %129 = arith.mulf %126, %73 : vector<8x32xf32>
    %130 = arith.mulf %125, %128 : vector<8x32xf32>
    %131 = arith.addf %129, %130 : vector<8x32xf32>
    %132 = arith.mulf %127, %131 : vector<8x32xf32>
    %133 = arith.index_cast %81 : i32 to index
    %c0_46 = arith.constant 0 : index
    %134 = vector.load %arg1[%133, %c0_46] : memref<64x32xf32, #tpu.memory_space<vmem>>, vector<8x32xf32>
    %135 = arith.addf %132, %134 : vector<8x32xf32>
    %136 = arith.index_cast %81 : i32 to index
    %c0_47 = arith.constant 0 : index
    %137 = vector.load %arg11[%136, %c0_47] : memref<64x32xf32, #tpu.memory_space<vmem>>, vector<8x32xf32>
    tpu.vector_store %arg11[%136, %c0_47], %135 {strides = array<i32>} : memref<64x32xf32, #tpu.memory_space<vmem>>, vector<8x32xf32>,
    %c2_i32 = arith.constant 2 : i32
    %c8_i32_48 = arith.constant 8 : i32
    %138 = arith.muli %c2_i32, %c8_i32_48 : i32
    %139 = tpu.assume_multiple %138, 8 : i32
    %140 = arith.index_cast %139 : i32 to index
    %c0_49 = arith.constant 0 : index
    %141 = vector.load %arg12[%140, %c0_49] : memref<64x128xf32, #tpu.memory_space<vmem>>, vector<8x128xf32>
    %cst_50 = arith.constant dense<0.000000e+00> : vector<8x128xf32>
    %142 = tpu.matmul %132, %14, %cst_50 {dimension_numbers = #tpu.dot_dimension_numbers<[1], [0], [0], [1], [0, 0, 1, 1], [], []>} : vector<8x32xf32>, vector<32x128xf32>, vector<8x128xf32> -> vector<8x128xf32>
    %143 = arith.addf %141, %142 : vector<8x128xf32>
    %cst_51 = arith.constant dense<0.000000e+00> : vector<8xf32>
    %144 = vector.multi_reduction <add>, %143, %cst_51 [1] : vector<8x128xf32> to vector<8xf32>
    %145 = vector.shape_cast %144 : vector<8xf32> to vector<8x1xf32>
    %146 = vector.broadcast %cst_23 : f32 to vector<8x1xf32>
    %147 = arith.mulf %145, %146 : vector<8x1xf32>
    %148 = arith.mulf %143, %143 : vector<8x128xf32>
    %cst_52 = arith.constant dense<0.000000e+00> : vector<8xf32>
    %149 = vector.multi_reduction <add>, %148, %cst_52 [1] : vector<8x128xf32> to vector<8xf32>
    %150 = vector.shape_cast %149 : vector<8xf32> to vector<8x1xf32>
    %151 = vector.broadcast %cst_23 : f32 to vector<8x1xf32>
    %152 = arith.mulf %150, %151 : vector<8x1xf32>
    %153 = arith.mulf %147, %147 : vector<8x1xf32>
    %154 = arith.subf %152, %153 : vector<8x1xf32>
    %155 = vector.broadcast %147 : vector<8x1xf32> to vector<8x128xf32>
    %156 = arith.subf %143, %155 : vector<8x128xf32>
    %cst_53 = arith.constant 9.99999997E-7 : f32
    %157 = vector.broadcast %cst_53 : f32 to vector<8x1xf32>
    %158 = arith.addf %154, %157 : vector<8x1xf32>
    %159 = math.rsqrt %158 : vector<8x1xf32>
    %160 = vector.broadcast %159 : vector<8x1xf32> to vector<8x128xf32>
    %161 = arith.mulf %156, %160 : vector<8x128xf32>
    %162 = vector.broadcast %15 : vector<1x128xf32> to vector<8x128xf32>
    %163 = arith.mulf %161, %162 : vector<8x128xf32>
    %164 = vector.broadcast %16 : vector<1x128xf32> to vector<8x128xf32>
    %165 = arith.addf %163, %164 : vector<8x128xf32>
    %cst_54 = arith.constant 2.000000e+00 : f32
    %166 = vector.broadcast %cst_54 : f32 to vector<8x128xf32>
    %167 = arith.mulf %166, %165 : vector<8x128xf32>
    %168 = vector.shape_cast %19 : vector<1x128xi1> to vector<1x128xi1>
    %169 = vector.broadcast %168 : vector<1x128xi1> to vector<8x128xi1>
    %170 = arith.select %169, %165, %167 : vector<8x128xi1>, vector<8x128xf32>
    %171 = arith.negf %170 : vector<8x128xf32>
    %172 = math.exp %171 : vector<8x128xf32>
    %cst_55 = arith.constant 1.000000e+00 : f32
    %173 = vector.broadcast %cst_55 : f32 to vector<8x128xf32>
    %174 = arith.addf %173, %172 : vector<8x128xf32>
    %175 = arith.divf %173, %174 : vector<8x128xf32>
    %cst_56 = arith.constant 2.000000e+00 : f32
    %176 = vector.broadcast %cst_56 : f32 to vector<8x128xf32>
    %177 = arith.mulf %176, %175 : vector<8x128xf32>
    %cst_57 = arith.constant 1.000000e+00 : f32
    %178 = vector.broadcast %cst_57 : f32 to vector<8x128xf32>
    %179 = arith.subf %177, %178 : vector<8x128xf32>
    %180 = vector.shape_cast %19 : vector<1x128xi1> to vector<1x128xi1>
    %181 = vector.broadcast %180 : vector<1x128xi1> to vector<8x128xi1>
    %182 = arith.select %181, %175, %179 : vector<8x128xi1>, vector<8x128xf32>
    %183 = vector.extract_strided_slice %182 {offsets = [0, 0], sizes = [8, 32], strides = [1, 1]} : vector<8x128xf32> to vector<8x32xf32>
    %184 = vector.extract_strided_slice %182 {offsets = [0, 32], sizes = [8, 32], strides = [1, 1]} : vector<8x128xf32> to vector<8x32xf32>
    %185 = vector.extract_strided_slice %182 {offsets = [0, 64], sizes = [8, 32], strides = [1, 1]} : vector<8x128xf32> to vector<8x32xf32>
    %186 = vector.extract_strided_slice %182 {offsets = [0, 96], sizes = [8, 32], strides = [1, 1]} : vector<8x128xf32> to vector<8x32xf32>
    %187 = arith.mulf %184, %131 : vector<8x32xf32>
    %188 = arith.mulf %183, %186 : vector<8x32xf32>
    %189 = arith.addf %187, %188 : vector<8x32xf32>
    %190 = arith.mulf %185, %189 : vector<8x32xf32>
    %191 = arith.index_cast %139 : i32 to index
    %c0_58 = arith.constant 0 : index
    %192 = vector.load %arg1[%191, %c0_58] : memref<64x32xf32, #tpu.memory_space<vmem>>, vector<8x32xf32>
    %193 = arith.addf %190, %192 : vector<8x32xf32>
    %194 = arith.index_cast %139 : i32 to index
    %c0_59 = arith.constant 0 : index
    %195 = vector.load %arg11[%194, %c0_59] : memref<64x32xf32, #tpu.memory_space<vmem>>, vector<8x32xf32>
    tpu.vector_store %arg11[%194, %c0_59], %193 {strides = array<i32>} : memref<64x32xf32, #tpu.memory_space<vmem>>, vector<8x32xf32>,
    %c3_i32 = arith.constant 3 : i32
    %c8_i32_60 = arith.constant 8 : i32
    %196 = arith.muli %c3_i32, %c8_i32_60 : i32
    %197 = tpu.assume_multiple %196, 8 : i32
    %198 = arith.index_cast %197 : i32 to index
    %c0_61 = arith.constant 0 : index
    %199 = vector.load %arg12[%198, %c0_61] : memref<64x128xf32, #tpu.memory_space<vmem>>, vector<8x128xf32>
    %cst_62 = arith.constant dense<0.000000e+00> : vector<8x128xf32>
    %200 = tpu.matmul %190, %14, %cst_62 {dimension_numbers = #tpu.dot_dimension_numbers<[1], [0], [0], [1], [0, 0, 1, 1], [], []>} : vector<8x32xf32>, vector<32x128xf32>, vector<8x128xf32> -> vector<8x128xf32>
    %201 = arith.addf %199, %200 : vector<8x128xf32>
    %cst_63 = arith.constant dense<0.000000e+00> : vector<8xf32>
    %202 = vector.multi_reduction <add>, %201, %cst_63 [1] : vector<8x128xf32> to vector<8xf32>
    %203 = vector.shape_cast %202 : vector<8xf32> to vector<8x1xf32>
    %204 = vector.broadcast %cst_23 : f32 to vector<8x1xf32>
    %205 = arith.mulf %203, %204 : vector<8x1xf32>
    %206 = arith.mulf %201, %201 : vector<8x128xf32>
    %cst_64 = arith.constant dense<0.000000e+00> : vector<8xf32>
    %207 = vector.multi_reduction <add>, %206, %cst_64 [1] : vector<8x128xf32> to vector<8xf32>
    %208 = vector.shape_cast %207 : vector<8xf32> to vector<8x1xf32>
    %209 = vector.broadcast %cst_23 : f32 to vector<8x1xf32>
    %210 = arith.mulf %208, %209 : vector<8x1xf32>
    %211 = arith.mulf %205, %205 : vector<8x1xf32>
    %212 = arith.subf %210, %211 : vector<8x1xf32>
    %213 = vector.broadcast %205 : vector<8x1xf32> to vector<8x128xf32>
    %214 = arith.subf %201, %213 : vector<8x128xf32>
    %cst_65 = arith.constant 9.99999997E-7 : f32
    %215 = vector.broadcast %cst_65 : f32 to vector<8x1xf32>
    %216 = arith.addf %212, %215 : vector<8x1xf32>
    %217 = math.rsqrt %216 : vector<8x1xf32>
    %218 = vector.broadcast %217 : vector<8x1xf32> to vector<8x128xf32>
    %219 = arith.mulf %214, %218 : vector<8x128xf32>
    %220 = vector.broadcast %15 : vector<1x128xf32> to vector<8x128xf32>
    %221 = arith.mulf %219, %220 : vector<8x128xf32>
    %222 = vector.broadcast %16 : vector<1x128xf32> to vector<8x128xf32>
    %223 = arith.addf %221, %222 : vector<8x128xf32>
    %cst_66 = arith.constant 2.000000e+00 : f32
    %224 = vector.broadcast %cst_66 : f32 to vector<8x128xf32>
    %225 = arith.mulf %224, %223 : vector<8x128xf32>
    %226 = vector.shape_cast %19 : vector<1x128xi1> to vector<1x128xi1>
    %227 = vector.broadcast %226 : vector<1x128xi1> to vector<8x128xi1>
    %228 = arith.select %227, %223, %225 : vector<8x128xi1>, vector<8x128xf32>
    %229 = arith.negf %228 : vector<8x128xf32>
    %230 = math.exp %229 : vector<8x128xf32>
    %cst_67 = arith.constant 1.000000e+00 : f32
    %231 = vector.broadcast %cst_67 : f32 to vector<8x128xf32>
    %232 = arith.addf %231, %230 : vector<8x128xf32>
    %233 = arith.divf %231, %232 : vector<8x128xf32>
    %cst_68 = arith.constant 2.000000e+00 : f32
    %234 = vector.broadcast %cst_68 : f32 to vector<8x128xf32>
    %235 = arith.mulf %234, %233 : vector<8x128xf32>
    %cst_69 = arith.constant 1.000000e+00 : f32
    %236 = vector.broadcast %cst_69 : f32 to vector<8x128xf32>
    %237 = arith.subf %235, %236 : vector<8x128xf32>
    %238 = vector.shape_cast %19 : vector<1x128xi1> to vector<1x128xi1>
    %239 = vector.broadcast %238 : vector<1x128xi1> to vector<8x128xi1>
    %240 = arith.select %239, %233, %237 : vector<8x128xi1>, vector<8x128xf32>
    %241 = vector.extract_strided_slice %240 {offsets = [0, 0], sizes = [8, 32], strides = [1, 1]} : vector<8x128xf32> to vector<8x32xf32>
    %242 = vector.extract_strided_slice %240 {offsets = [0, 32], sizes = [8, 32], strides = [1, 1]} : vector<8x128xf32> to vector<8x32xf32>
    %243 = vector.extract_strided_slice %240 {offsets = [0, 64], sizes = [8, 32], strides = [1, 1]} : vector<8x128xf32> to vector<8x32xf32>
    %244 = vector.extract_strided_slice %240 {offsets = [0, 96], sizes = [8, 32], strides = [1, 1]} : vector<8x128xf32> to vector<8x32xf32>
    %245 = arith.mulf %242, %189 : vector<8x32xf32>
    %246 = arith.mulf %241, %244 : vector<8x32xf32>
    %247 = arith.addf %245, %246 : vector<8x32xf32>
    %248 = arith.mulf %243, %247 : vector<8x32xf32>
    %249 = arith.index_cast %197 : i32 to index
    %c0_70 = arith.constant 0 : index
    %250 = vector.load %arg1[%249, %c0_70] : memref<64x32xf32, #tpu.memory_space<vmem>>, vector<8x32xf32>
    %251 = arith.addf %248, %250 : vector<8x32xf32>
    %252 = arith.index_cast %197 : i32 to index
    %c0_71 = arith.constant 0 : index
    %253 = vector.load %arg11[%252, %c0_71] : memref<64x32xf32, #tpu.memory_space<vmem>>, vector<8x32xf32>
    tpu.vector_store %arg11[%252, %c0_71], %251 {strides = array<i32>} : memref<64x32xf32, #tpu.memory_space<vmem>>, vector<8x32xf32>,
    %c4_i32 = arith.constant 4 : i32
    %c8_i32_72 = arith.constant 8 : i32
    %254 = arith.muli %c4_i32, %c8_i32_72 : i32
    %255 = tpu.assume_multiple %254, 8 : i32
    %256 = arith.index_cast %255 : i32 to index
    %c0_73 = arith.constant 0 : index
    %257 = vector.load %arg12[%256, %c0_73] : memref<64x128xf32, #tpu.memory_space<vmem>>, vector<8x128xf32>
    %cst_74 = arith.constant dense<0.000000e+00> : vector<8x128xf32>
    %258 = tpu.matmul %248, %14, %cst_74 {dimension_numbers = #tpu.dot_dimension_numbers<[1], [0], [0], [1], [0, 0, 1, 1], [], []>} : vector<8x32xf32>, vector<32x128xf32>, vector<8x128xf32> -> vector<8x128xf32>
    %259 = arith.addf %257, %258 : vector<8x128xf32>
    %cst_75 = arith.constant dense<0.000000e+00> : vector<8xf32>
    %260 = vector.multi_reduction <add>, %259, %cst_75 [1] : vector<8x128xf32> to vector<8xf32>
    %261 = vector.shape_cast %260 : vector<8xf32> to vector<8x1xf32>
    %262 = vector.broadcast %cst_23 : f32 to vector<8x1xf32>
    %263 = arith.mulf %261, %262 : vector<8x1xf32>
    %264 = arith.mulf %259, %259 : vector<8x128xf32>
    %cst_76 = arith.constant dense<0.000000e+00> : vector<8xf32>
    %265 = vector.multi_reduction <add>, %264, %cst_76 [1] : vector<8x128xf32> to vector<8xf32>
    %266 = vector.shape_cast %265 : vector<8xf32> to vector<8x1xf32>
    %267 = vector.broadcast %cst_23 : f32 to vector<8x1xf32>
    %268 = arith.mulf %266, %267 : vector<8x1xf32>
    %269 = arith.mulf %263, %263 : vector<8x1xf32>
    %270 = arith.subf %268, %269 : vector<8x1xf32>
    %271 = vector.broadcast %263 : vector<8x1xf32> to vector<8x128xf32>
    %272 = arith.subf %259, %271 : vector<8x128xf32>
    %cst_77 = arith.constant 9.99999997E-7 : f32
    %273 = vector.broadcast %cst_77 : f32 to vector<8x1xf32>
    %274 = arith.addf %270, %273 : vector<8x1xf32>
    %275 = math.rsqrt %274 : vector<8x1xf32>
    %276 = vector.broadcast %275 : vector<8x1xf32> to vector<8x128xf32>
    %277 = arith.mulf %272, %276 : vector<8x128xf32>
    %278 = vector.broadcast %15 : vector<1x128xf32> to vector<8x128xf32>
    %279 = arith.mulf %277, %278 : vector<8x128xf32>
    %280 = vector.broadcast %16 : vector<1x128xf32> to vector<8x128xf32>
    %281 = arith.addf %279, %280 : vector<8x128xf32>
    %cst_78 = arith.constant 2.000000e+00 : f32
    %282 = vector.broadcast %cst_78 : f32 to vector<8x128xf32>
    %283 = arith.mulf %282, %281 : vector<8x128xf32>
    %284 = vector.shape_cast %19 : vector<1x128xi1> to vector<1x128xi1>
    %285 = vector.broadcast %284 : vector<1x128xi1> to vector<8x128xi1>
    %286 = arith.select %285, %281, %283 : vector<8x128xi1>, vector<8x128xf32>
    %287 = arith.negf %286 : vector<8x128xf32>
    %288 = math.exp %287 : vector<8x128xf32>
    %cst_79 = arith.constant 1.000000e+00 : f32
    %289 = vector.broadcast %cst_79 : f32 to vector<8x128xf32>
    %290 = arith.addf %289, %288 : vector<8x128xf32>
    %291 = arith.divf %289, %290 : vector<8x128xf32>
    %cst_80 = arith.constant 2.000000e+00 : f32
    %292 = vector.broadcast %cst_80 : f32 to vector<8x128xf32>
    %293 = arith.mulf %292, %291 : vector<8x128xf32>
    %cst_81 = arith.constant 1.000000e+00 : f32
    %294 = vector.broadcast %cst_81 : f32 to vector<8x128xf32>
    %295 = arith.subf %293, %294 : vector<8x128xf32>
    %296 = vector.shape_cast %19 : vector<1x128xi1> to vector<1x128xi1>
    %297 = vector.broadcast %296 : vector<1x128xi1> to vector<8x128xi1>
    %298 = arith.select %297, %291, %295 : vector<8x128xi1>, vector<8x128xf32>
    %299 = vector.extract_strided_slice %298 {offsets = [0, 0], sizes = [8, 32], strides = [1, 1]} : vector<8x128xf32> to vector<8x32xf32>
    %300 = vector.extract_strided_slice %298 {offsets = [0, 32], sizes = [8, 32], strides = [1, 1]} : vector<8x128xf32> to vector<8x32xf32>
    %301 = vector.extract_strided_slice %298 {offsets = [0, 64], sizes = [8, 32], strides = [1, 1]} : vector<8x128xf32> to vector<8x32xf32>
    %302 = vector.extract_strided_slice %298 {offsets = [0, 96], sizes = [8, 32], strides = [1, 1]} : vector<8x128xf32> to vector<8x32xf32>
    %303 = arith.mulf %300, %247 : vector<8x32xf32>
    %304 = arith.mulf %299, %302 : vector<8x32xf32>
    %305 = arith.addf %303, %304 : vector<8x32xf32>
    %306 = arith.mulf %301, %305 : vector<8x32xf32>
    %307 = arith.index_cast %255 : i32 to index
    %c0_82 = arith.constant 0 : index
    %308 = vector.load %arg1[%307, %c0_82] : memref<64x32xf32, #tpu.memory_space<vmem>>, vector<8x32xf32>
    %309 = arith.addf %306, %308 : vector<8x32xf32>
    %310 = arith.index_cast %255 : i32 to index
    %c0_83 = arith.constant 0 : index
    %311 = vector.load %arg11[%310, %c0_83] : memref<64x32xf32, #tpu.memory_space<vmem>>, vector<8x32xf32>
    tpu.vector_store %arg11[%310, %c0_83], %309 {strides = array<i32>} : memref<64x32xf32, #tpu.memory_space<vmem>>, vector<8x32xf32>,
    %c5_i32 = arith.constant 5 : i32
    %c8_i32_84 = arith.constant 8 : i32
    %312 = arith.muli %c5_i32, %c8_i32_84 : i32
    %313 = tpu.assume_multiple %312, 8 : i32
    %314 = arith.index_cast %313 : i32 to index
    %c0_85 = arith.constant 0 : index
    %315 = vector.load %arg12[%314, %c0_85] : memref<64x128xf32, #tpu.memory_space<vmem>>, vector<8x128xf32>
    %cst_86 = arith.constant dense<0.000000e+00> : vector<8x128xf32>
    %316 = tpu.matmul %306, %14, %cst_86 {dimension_numbers = #tpu.dot_dimension_numbers<[1], [0], [0], [1], [0, 0, 1, 1], [], []>} : vector<8x32xf32>, vector<32x128xf32>, vector<8x128xf32> -> vector<8x128xf32>
    %317 = arith.addf %315, %316 : vector<8x128xf32>
    %cst_87 = arith.constant dense<0.000000e+00> : vector<8xf32>
    %318 = vector.multi_reduction <add>, %317, %cst_87 [1] : vector<8x128xf32> to vector<8xf32>
    %319 = vector.shape_cast %318 : vector<8xf32> to vector<8x1xf32>
    %320 = vector.broadcast %cst_23 : f32 to vector<8x1xf32>
    %321 = arith.mulf %319, %320 : vector<8x1xf32>
    %322 = arith.mulf %317, %317 : vector<8x128xf32>
    %cst_88 = arith.constant dense<0.000000e+00> : vector<8xf32>
    %323 = vector.multi_reduction <add>, %322, %cst_88 [1] : vector<8x128xf32> to vector<8xf32>
    %324 = vector.shape_cast %323 : vector<8xf32> to vector<8x1xf32>
    %325 = vector.broadcast %cst_23 : f32 to vector<8x1xf32>
    %326 = arith.mulf %324, %325 : vector<8x1xf32>
    %327 = arith.mulf %321, %321 : vector<8x1xf32>
    %328 = arith.subf %326, %327 : vector<8x1xf32>
    %329 = vector.broadcast %321 : vector<8x1xf32> to vector<8x128xf32>
    %330 = arith.subf %317, %329 : vector<8x128xf32>
    %cst_89 = arith.constant 9.99999997E-7 : f32
    %331 = vector.broadcast %cst_89 : f32 to vector<8x1xf32>
    %332 = arith.addf %328, %331 : vector<8x1xf32>
    %333 = math.rsqrt %332 : vector<8x1xf32>
    %334 = vector.broadcast %333 : vector<8x1xf32> to vector<8x128xf32>
    %335 = arith.mulf %330, %334 : vector<8x128xf32>
    %336 = vector.broadcast %15 : vector<1x128xf32> to vector<8x128xf32>
    %337 = arith.mulf %335, %336 : vector<8x128xf32>
    %338 = vector.broadcast %16 : vector<1x128xf32> to vector<8x128xf32>
    %339 = arith.addf %337, %338 : vector<8x128xf32>
    %cst_90 = arith.constant 2.000000e+00 : f32
    %340 = vector.broadcast %cst_90 : f32 to vector<8x128xf32>
    %341 = arith.mulf %340, %339 : vector<8x128xf32>
    %342 = vector.shape_cast %19 : vector<1x128xi1> to vector<1x128xi1>
    %343 = vector.broadcast %342 : vector<1x128xi1> to vector<8x128xi1>
    %344 = arith.select %343, %339, %341 : vector<8x128xi1>, vector<8x128xf32>
    %345 = arith.negf %344 : vector<8x128xf32>
    %346 = math.exp %345 : vector<8x128xf32>
    %cst_91 = arith.constant 1.000000e+00 : f32
    %347 = vector.broadcast %cst_91 : f32 to vector<8x128xf32>
    %348 = arith.addf %347, %346 : vector<8x128xf32>
    %349 = arith.divf %347, %348 : vector<8x128xf32>
    %cst_92 = arith.constant 2.000000e+00 : f32
    %350 = vector.broadcast %cst_92 : f32 to vector<8x128xf32>
    %351 = arith.mulf %350, %349 : vector<8x128xf32>
    %cst_93 = arith.constant 1.000000e+00 : f32
    %352 = vector.broadcast %cst_93 : f32 to vector<8x128xf32>
    %353 = arith.subf %351, %352 : vector<8x128xf32>
    %354 = vector.shape_cast %19 : vector<1x128xi1> to vector<1x128xi1>
    %355 = vector.broadcast %354 : vector<1x128xi1> to vector<8x128xi1>
    %356 = arith.select %355, %349, %353 : vector<8x128xi1>, vector<8x128xf32>
    %357 = vector.extract_strided_slice %356 {offsets = [0, 0], sizes = [8, 32], strides = [1, 1]} : vector<8x128xf32> to vector<8x32xf32>
    %358 = vector.extract_strided_slice %356 {offsets = [0, 32], sizes = [8, 32], strides = [1, 1]} : vector<8x128xf32> to vector<8x32xf32>
    %359 = vector.extract_strided_slice %356 {offsets = [0, 64], sizes = [8, 32], strides = [1, 1]} : vector<8x128xf32> to vector<8x32xf32>
    %360 = vector.extract_strided_slice %356 {offsets = [0, 96], sizes = [8, 32], strides = [1, 1]} : vector<8x128xf32> to vector<8x32xf32>
    %361 = arith.mulf %358, %305 : vector<8x32xf32>
    %362 = arith.mulf %357, %360 : vector<8x32xf32>
    %363 = arith.addf %361, %362 : vector<8x32xf32>
    %364 = arith.mulf %359, %363 : vector<8x32xf32>
    %365 = arith.index_cast %313 : i32 to index
    %c0_94 = arith.constant 0 : index
    %366 = vector.load %arg1[%365, %c0_94] : memref<64x32xf32, #tpu.memory_space<vmem>>, vector<8x32xf32>
    %367 = arith.addf %364, %366 : vector<8x32xf32>
    %368 = arith.index_cast %313 : i32 to index
    %c0_95 = arith.constant 0 : index
    %369 = vector.load %arg11[%368, %c0_95] : memref<64x32xf32, #tpu.memory_space<vmem>>, vector<8x32xf32>
    tpu.vector_store %arg11[%368, %c0_95], %367 {strides = array<i32>} : memref<64x32xf32, #tpu.memory_space<vmem>>, vector<8x32xf32>,
    %c6_i32 = arith.constant 6 : i32
    %c8_i32_96 = arith.constant 8 : i32
    %370 = arith.muli %c6_i32, %c8_i32_96 : i32
    %371 = tpu.assume_multiple %370, 8 : i32
    %372 = arith.index_cast %371 : i32 to index
    %c0_97 = arith.constant 0 : index
    %373 = vector.load %arg12[%372, %c0_97] : memref<64x128xf32, #tpu.memory_space<vmem>>, vector<8x128xf32>
    %cst_98 = arith.constant dense<0.000000e+00> : vector<8x128xf32>
    %374 = tpu.matmul %364, %14, %cst_98 {dimension_numbers = #tpu.dot_dimension_numbers<[1], [0], [0], [1], [0, 0, 1, 1], [], []>} : vector<8x32xf32>, vector<32x128xf32>, vector<8x128xf32> -> vector<8x128xf32>
    %375 = arith.addf %373, %374 : vector<8x128xf32>
    %cst_99 = arith.constant dense<0.000000e+00> : vector<8xf32>
    %376 = vector.multi_reduction <add>, %375, %cst_99 [1] : vector<8x128xf32> to vector<8xf32>
    %377 = vector.shape_cast %376 : vector<8xf32> to vector<8x1xf32>
    %378 = vector.broadcast %cst_23 : f32 to vector<8x1xf32>
    %379 = arith.mulf %377, %378 : vector<8x1xf32>
    %380 = arith.mulf %375, %375 : vector<8x128xf32>
    %cst_100 = arith.constant dense<0.000000e+00> : vector<8xf32>
    %381 = vector.multi_reduction <add>, %380, %cst_100 [1] : vector<8x128xf32> to vector<8xf32>
    %382 = vector.shape_cast %381 : vector<8xf32> to vector<8x1xf32>
    %383 = vector.broadcast %cst_23 : f32 to vector<8x1xf32>
    %384 = arith.mulf %382, %383 : vector<8x1xf32>
    %385 = arith.mulf %379, %379 : vector<8x1xf32>
    %386 = arith.subf %384, %385 : vector<8x1xf32>
    %387 = vector.broadcast %379 : vector<8x1xf32> to vector<8x128xf32>
    %388 = arith.subf %375, %387 : vector<8x128xf32>
    %cst_101 = arith.constant 9.99999997E-7 : f32
    %389 = vector.broadcast %cst_101 : f32 to vector<8x1xf32>
    %390 = arith.addf %386, %389 : vector<8x1xf32>
    %391 = math.rsqrt %390 : vector<8x1xf32>
    %392 = vector.broadcast %391 : vector<8x1xf32> to vector<8x128xf32>
    %393 = arith.mulf %388, %392 : vector<8x128xf32>
    %394 = vector.broadcast %15 : vector<1x128xf32> to vector<8x128xf32>
    %395 = arith.mulf %393, %394 : vector<8x128xf32>
    %396 = vector.broadcast %16 : vector<1x128xf32> to vector<8x128xf32>
    %397 = arith.addf %395, %396 : vector<8x128xf32>
    %cst_102 = arith.constant 2.000000e+00 : f32
    %398 = vector.broadcast %cst_102 : f32 to vector<8x128xf32>
    %399 = arith.mulf %398, %397 : vector<8x128xf32>
    %400 = vector.shape_cast %19 : vector<1x128xi1> to vector<1x128xi1>
    %401 = vector.broadcast %400 : vector<1x128xi1> to vector<8x128xi1>
    %402 = arith.select %401, %397, %399 : vector<8x128xi1>, vector<8x128xf32>
    %403 = arith.negf %402 : vector<8x128xf32>
    %404 = math.exp %403 : vector<8x128xf32>
    %cst_103 = arith.constant 1.000000e+00 : f32
    %405 = vector.broadcast %cst_103 : f32 to vector<8x128xf32>
    %406 = arith.addf %405, %404 : vector<8x128xf32>
    %407 = arith.divf %405, %406 : vector<8x128xf32>
    %cst_104 = arith.constant 2.000000e+00 : f32
    %408 = vector.broadcast %cst_104 : f32 to vector<8x128xf32>
    %409 = arith.mulf %408, %407 : vector<8x128xf32>
    %cst_105 = arith.constant 1.000000e+00 : f32
    %410 = vector.broadcast %cst_105 : f32 to vector<8x128xf32>
    %411 = arith.subf %409, %410 : vector<8x128xf32>
    %412 = vector.shape_cast %19 : vector<1x128xi1> to vector<1x128xi1>
    %413 = vector.broadcast %412 : vector<1x128xi1> to vector<8x128xi1>
    %414 = arith.select %413, %407, %411 : vector<8x128xi1>, vector<8x128xf32>
    %415 = vector.extract_strided_slice %414 {offsets = [0, 0], sizes = [8, 32], strides = [1, 1]} : vector<8x128xf32> to vector<8x32xf32>
    %416 = vector.extract_strided_slice %414 {offsets = [0, 32], sizes = [8, 32], strides = [1, 1]} : vector<8x128xf32> to vector<8x32xf32>
    %417 = vector.extract_strided_slice %414 {offsets = [0, 64], sizes = [8, 32], strides = [1, 1]} : vector<8x128xf32> to vector<8x32xf32>
    %418 = vector.extract_strided_slice %414 {offsets = [0, 96], sizes = [8, 32], strides = [1, 1]} : vector<8x128xf32> to vector<8x32xf32>
    %419 = arith.mulf %416, %363 : vector<8x32xf32>
    %420 = arith.mulf %415, %418 : vector<8x32xf32>
    %421 = arith.addf %419, %420 : vector<8x32xf32>
    %422 = arith.mulf %417, %421 : vector<8x32xf32>
    %423 = arith.index_cast %371 : i32 to index
    %c0_106 = arith.constant 0 : index
    %424 = vector.load %arg1[%423, %c0_106] : memref<64x32xf32, #tpu.memory_space<vmem>>, vector<8x32xf32>
    %425 = arith.addf %422, %424 : vector<8x32xf32>
    %426 = arith.index_cast %371 : i32 to index
    %c0_107 = arith.constant 0 : index
    %427 = vector.load %arg11[%426, %c0_107] : memref<64x32xf32, #tpu.memory_space<vmem>>, vector<8x32xf32>
    tpu.vector_store %arg11[%426, %c0_107], %425 {strides = array<i32>} : memref<64x32xf32, #tpu.memory_space<vmem>>, vector<8x32xf32>,
    %c7_i32 = arith.constant 7 : i32
    %c8_i32_108 = arith.constant 8 : i32
    %428 = arith.muli %c7_i32, %c8_i32_108 : i32
    %429 = tpu.assume_multiple %428, 8 : i32
    %430 = arith.index_cast %429 : i32 to index
    %c0_109 = arith.constant 0 : index
    %431 = vector.load %arg12[%430, %c0_109] : memref<64x128xf32, #tpu.memory_space<vmem>>, vector<8x128xf32>
    %cst_110 = arith.constant dense<0.000000e+00> : vector<8x128xf32>
    %432 = tpu.matmul %422, %14, %cst_110 {dimension_numbers = #tpu.dot_dimension_numbers<[1], [0], [0], [1], [0, 0, 1, 1], [], []>} : vector<8x32xf32>, vector<32x128xf32>, vector<8x128xf32> -> vector<8x128xf32>
    %433 = arith.addf %431, %432 : vector<8x128xf32>
    %cst_111 = arith.constant dense<0.000000e+00> : vector<8xf32>
    %434 = vector.multi_reduction <add>, %433, %cst_111 [1] : vector<8x128xf32> to vector<8xf32>
    %435 = vector.shape_cast %434 : vector<8xf32> to vector<8x1xf32>
    %436 = vector.broadcast %cst_23 : f32 to vector<8x1xf32>
    %437 = arith.mulf %435, %436 : vector<8x1xf32>
    %438 = arith.mulf %433, %433 : vector<8x128xf32>
    %cst_112 = arith.constant dense<0.000000e+00> : vector<8xf32>
    %439 = vector.multi_reduction <add>, %438, %cst_112 [1] : vector<8x128xf32> to vector<8xf32>
    %440 = vector.shape_cast %439 : vector<8xf32> to vector<8x1xf32>
    %441 = vector.broadcast %cst_23 : f32 to vector<8x1xf32>
    %442 = arith.mulf %440, %441 : vector<8x1xf32>
    %443 = arith.mulf %437, %437 : vector<8x1xf32>
    %444 = arith.subf %442, %443 : vector<8x1xf32>
    %445 = vector.broadcast %437 : vector<8x1xf32> to vector<8x128xf32>
    %446 = arith.subf %433, %445 : vector<8x128xf32>
    %cst_113 = arith.constant 9.99999997E-7 : f32
    %447 = vector.broadcast %cst_113 : f32 to vector<8x1xf32>
    %448 = arith.addf %444, %447 : vector<8x1xf32>
    %449 = math.rsqrt %448 : vector<8x1xf32>
    %450 = vector.broadcast %449 : vector<8x1xf32> to vector<8x128xf32>
    %451 = arith.mulf %446, %450 : vector<8x128xf32>
    %452 = vector.broadcast %15 : vector<1x128xf32> to vector<8x128xf32>
    %453 = arith.mulf %451, %452 : vector<8x128xf32>
    %454 = vector.broadcast %16 : vector<1x128xf32> to vector<8x128xf32>
    %455 = arith.addf %453, %454 : vector<8x128xf32>
    %cst_114 = arith.constant 2.000000e+00 : f32
    %456 = vector.broadcast %cst_114 : f32 to vector<8x128xf32>
    %457 = arith.mulf %456, %455 : vector<8x128xf32>
    %458 = vector.shape_cast %19 : vector<1x128xi1> to vector<1x128xi1>
    %459 = vector.broadcast %458 : vector<1x128xi1> to vector<8x128xi1>
    %460 = arith.select %459, %455, %457 : vector<8x128xi1>, vector<8x128xf32>
    %461 = arith.negf %460 : vector<8x128xf32>
    %462 = math.exp %461 : vector<8x128xf32>
    %cst_115 = arith.constant 1.000000e+00 : f32
    %463 = vector.broadcast %cst_115 : f32 to vector<8x128xf32>
    %464 = arith.addf %463, %462 : vector<8x128xf32>
    %465 = arith.divf %463, %464 : vector<8x128xf32>
    %cst_116 = arith.constant 2.000000e+00 : f32
    %466 = vector.broadcast %cst_116 : f32 to vector<8x128xf32>
    %467 = arith.mulf %466, %465 : vector<8x128xf32>
    %cst_117 = arith.constant 1.000000e+00 : f32
    %468 = vector.broadcast %cst_117 : f32 to vector<8x128xf32>
    %469 = arith.subf %467, %468 : vector<8x128xf32>
    %470 = vector.shape_cast %19 : vector<1x128xi1> to vector<1x128xi1>
    %471 = vector.broadcast %470 : vector<1x128xi1> to vector<8x128xi1>
    %472 = arith.select %471, %465, %469 : vector<8x128xi1>, vector<8x128xf32>
    %473 = vector.extract_strided_slice %472 {offsets = [0, 0], sizes = [8, 32], strides = [1, 1]} : vector<8x128xf32> to vector<8x32xf32>
    %474 = vector.extract_strided_slice %472 {offsets = [0, 32], sizes = [8, 32], strides = [1, 1]} : vector<8x128xf32> to vector<8x32xf32>
    %475 = vector.extract_strided_slice %472 {offsets = [0, 64], sizes = [8, 32], strides = [1, 1]} : vector<8x128xf32> to vector<8x32xf32>
    %476 = vector.extract_strided_slice %472 {offsets = [0, 96], sizes = [8, 32], strides = [1, 1]} : vector<8x128xf32> to vector<8x32xf32>
    %477 = arith.mulf %474, %421 : vector<8x32xf32>
    %478 = arith.mulf %473, %476 : vector<8x32xf32>
    %479 = arith.addf %477, %478 : vector<8x32xf32>
    %480 = arith.mulf %475, %479 : vector<8x32xf32>
    %481 = arith.index_cast %429 : i32 to index
    %c0_118 = arith.constant 0 : index
    %482 = vector.load %arg1[%481, %c0_118] : memref<64x32xf32, #tpu.memory_space<vmem>>, vector<8x32xf32>
    %483 = arith.addf %480, %482 : vector<8x32xf32>
    %484 = arith.index_cast %429 : i32 to index
    %c0_119 = arith.constant 0 : index
    %485 = vector.load %arg11[%484, %c0_119] : memref<64x32xf32, #tpu.memory_space<vmem>>, vector<8x32xf32>
    tpu.vector_store %arg11[%484, %c0_119], %483 {strides = array<i32>} : memref<64x32xf32, #tpu.memory_space<vmem>>, vector<8x32xf32>,
    %c8_i32_120 = arith.constant 8 : i32
    %c0_121 = arith.constant 0 : index
    %c0_122 = arith.constant 0 : index
    %486 = vector.load %arg13[%c0_121, %c0_122] : memref<8x32xf32, #tpu.memory_space<vmem>>, vector<8x32xf32>
    tpu.vector_store %arg13[%c0_121, %c0_122], %480 {strides = array<i32>} : memref<8x32xf32, #tpu.memory_space<vmem>>, vector<8x32xf32>,
    %c0_123 = arith.constant 0 : index
    %c0_124 = arith.constant 0 : index
    %487 = vector.load %arg14[%c0_123, %c0_124] : memref<8x32xf32, #tpu.memory_space<vmem>>, vector<8x32xf32>
    tpu.vector_store %arg14[%c0_123, %c0_124], %479 {strides = array<i32>} : memref<8x32xf32, #tpu.memory_space<vmem>>, vector<8x32xf32>,
    return
  }
  func.func @transform_0(%arg0: i32) -> (i32, i32) {
    %c0_i32 = arith.constant 0 : i32
    %c0_i32_0 = arith.constant 0 : i32
    return %arg0, %c0_i32 : i32, i32
  }
  func.func @transform_1(%arg0: i32) -> (i32, i32) {
    %c0_i32 = arith.constant 0 : i32
    %c0_i32_0 = arith.constant 0 : i32
    return %arg0, %c0_i32 : i32, i32
  }
  func.func @transform_2(%arg0: i32) -> (i32, i32) {
    %c0_i32 = arith.constant 0 : i32
    %c0_i32_0 = arith.constant 0 : i32
    %c0_i32_1 = arith.constant 0 : i32
    return %c0_i32, %c0_i32_0 : i32, i32
  }
  func.func @transform_3(%arg0: i32) -> (i32, i32) {
    %c0_i32 = arith.constant 0 : i32
    %c0_i32_0 = arith.constant 0 : i32
    %c0_i32_1 = arith.constant 0 : i32
    return %c0_i32, %c0_i32_0 : i32, i32
  }
  func.func @transform_4(%arg0: i32) -> (i32, i32) {
    %c0_i32 = arith.constant 0 : i32
    %c0_i32_0 = arith.constant 0 : i32
    %c0_i32_1 = arith.constant 0 : i32
    return %c0_i32, %c0_i32_0 : i32, i32
  }
  func.func @transform_5(%arg0: i32) -> (i32, i32) {
    %c0_i32 = arith.constant 0 : i32
    %c0_i32_0 = arith.constant 0 : i32
    %c0_i32_1 = arith.constant 0 : i32
    return %c0_i32, %c0_i32_0 : i32, i32
  }
  func.func @transform_6(%arg0: i32) -> (i32, i32) {
    %c0_i32 = arith.constant 0 : i32
    %c0_i32_0 = arith.constant 0 : i32
    %c0_i32_1 = arith.constant 0 : i32
    return %c0_i32, %c0_i32_0 : i32, i32
  }
  func.func @transform_7(%arg0: i32) -> (i32, i32) {
    %c0_i32 = arith.constant 0 : i32
    %c0_i32_0 = arith.constant 0 : i32
    %c0_i32_1 = arith.constant 0 : i32
    return %c0_i32, %c0_i32_0 : i32, i32
  }
  func.func @transform_8(%arg0: i32) -> (i32, i32) {
    %c0_i32 = arith.constant 0 : i32
    %c0_i32_0 = arith.constant 0 : i32
    %c0_i32_1 = arith.constant 0 : i32
    return %c0_i32, %c0_i32_0 : i32, i32
  }
  func.func @transform_9(%arg0: i32) -> (i32, i32) {
    %c0_i32 = arith.constant 0 : i32
    %c0_i32_0 = arith.constant 0 : i32
    %c0_i32_1 = arith.constant 0 : i32
    return %c0_i32, %c0_i32_0 : i32, i32
  }
  func.func @transform_10(%arg0: i32) -> (i32, i32) {
    %c0_i32 = arith.constant 0 : i32
    %c0_i32_0 = arith.constant 0 : i32
    return %arg0, %c0_i32 : i32, i32
  }
}

</mosaic_0001>

<llo_original>
// kernel: decoder_layer_forward.1
$region0: #{decoder_layer_forward.1}
  #allocation0 [shape = 'u32[]', space=smem, size = 0x4, offset = 0x4, fixed_abs, tag = 'smem constant byte address 0x4 - core index']
  #allocation1 [shape = 'u32[144,128]{1,0:T(1,128)}', space=vmem, size = 0x12000, scoped, tag = 'internal scratch']
  #allocation2 [shape = 'f32[64,128]{1,0:T(8,128)}', space=vmem, size = 0x8000, scoped, tag = 'scratch operand']
  #allocation3 [shape = 'f32[8,32]{1,0:T(8,128)}', space=vmem, size = 0x1000, scoped, tag = 'scratch operand']
  #allocation4 [shape = 'f32[8,32]{1,0:T(8,128)}', space=vmem, size = 0x1000, scoped, tag = 'scratch operand']
  %s0 = inlined_call_operand.vmem [shape: f32[64,32], index: 0, kind: input, shape index: {}]
  %s1 = inlined_call_operand.vmem [shape: f32[64,32], index: 1, kind: input, shape index: {}]
  %s2 = inlined_call_operand.vmem [shape: f32[32,128], index: 2, kind: input, shape index: {}]
  %s3 = inlined_call_operand.vmem [shape: f32[32,128], index: 3, kind: input, shape index: {}]
  %s4 = inlined_call_operand.vmem [shape: f32[32,128], index: 4, kind: input, shape index: {}]
  %s5 = inlined_call_operand.vmem [shape: f32[1,128], index: 5, kind: input, shape index: {}]
  %s6 = inlined_call_operand.vmem [shape: f32[1,128], index: 6, kind: input, shape index: {}]
  %s7 = inlined_call_operand.vmem [shape: f32[1,128], index: 7, kind: input, shape index: {}]
  %s8 = inlined_call_operand.vmem [shape: f32[1,32], index: 8, kind: input, shape index: {}]
  %s9 = inlined_call_operand.vmem [shape: f32[1,32], index: 9, kind: input, shape index: {}]
  %s10 = inlined_call_operand.vmem [shape: f32[64,32], index: 10, kind: output, shape index: {}]
  %s11 = sld [smem:[#allocation0]]
  $region54: #{decoder_layer_forward.1} parent=0
    _
  %s13 = ssub.s32 1, %s11
  %s14 = scalar_select 0, %s13, %s11
  // Predicated region
  $region2: #{decoder_layer_forward.1} parent=0 // pred_check
    _
  $region3: #{decoder_layer_forward.1} parent=0 // pred_check_branch
    %16 = sbr.rel (0) target = $region5
  $region4: #{decoder_layer_forward.1} parent=0 // pred_region
    _
  $region5: #{decoder_layer_forward.1} parent=0 // pred_fallthru
    _
  // Predicated region
  $region6: #{decoder_layer_forward.1} parent=0 // pred_check
    _
  $region7: #{decoder_layer_forward.1} parent=0 // pred_check_branch
    %18 = sbr.rel (0) target = $region9
  $region8: #{decoder_layer_forward.1} parent=0 // pred_region
    _
  $region9: #{decoder_layer_forward.1} parent=0 // pred_fallthru
    _
  // Predicated region
  $region10: #{decoder_layer_forward.1} parent=0 // pred_check
    _
  $region11: #{decoder_layer_forward.1} parent=0 // pred_check_branch
    %20 = sbr.rel (0) target = $region13
  $region12: #{decoder_layer_forward.1} parent=0 // pred_region
    _
  $region13: #{decoder_layer_forward.1} parent=0 // pred_fallthru
    _
  // Predicated region
  $region14: #{decoder_layer_forward.1} parent=0 // pred_check
    _
  $region15: #{decoder_layer_forward.1} parent=0 // pred_check_branch
    %22 = sbr.rel (0) target = $region17
  $region16: #{decoder_layer_forward.1} parent=0 // pred_region
    _
  $region17: #{decoder_layer_forward.1} parent=0 // pred_fallthru
    _
  // Predicated region
  $region18: #{decoder_layer_forward.1} parent=0 // pred_check
    _
  $region19: #{decoder_layer_forward.1} parent=0 // pred_check_branch
    %24 = sbr.rel (0) target = $region21
  $region20: #{decoder_layer_forward.1} parent=0 // pred_region
    _
  $region21: #{decoder_layer_forward.1} parent=0 // pred_fallthru
    _
  // Predicated region
  $region22: #{decoder_layer_forward.1} parent=0 // pred_check
    _
  $region23: #{decoder_layer_forward.1} parent=0 // pred_check_branch
    %26 = sbr.rel (0) target = $region25
  $region24: #{decoder_layer_forward.1} parent=0 // pred_region
    _
  $region25: #{decoder_layer_forward.1} parent=0 // pred_fallthru
    _
  // Predicated region
  $region26: #{decoder_layer_forward.1} parent=0 // pred_check
    _
  $region27: #{decoder_layer_forward.1} parent=0 // pred_check_branch
    %28 = sbr.rel (0) target = $region29
  $region28: #{decoder_layer_forward.1} parent=0 // pred_region
    _
  $region29: #{decoder_layer_forward.1} parent=0 // pred_fallthru
    _
  // Predicated region
  $region30: #{decoder_layer_forward.1} parent=0 // pred_check
    _
  $region31: #{decoder_layer_forward.1} parent=0 // pred_check_branch
    %30 = sbr.rel (0) target = $region33
  $region32: #{decoder_layer_forward.1} parent=0 // pred_region
    _
  $region33: #{decoder_layer_forward.1} parent=0 // pred_fallthru
    _
  // Predicated region
  $region34: #{decoder_layer_forward.1} parent=0 // pred_check
    _
  $region35: #{decoder_layer_forward.1} parent=0 // pred_check_branch
    %32 = sbr.rel (0) target = $region37
  $region36: #{decoder_layer_forward.1} parent=0 // pred_region
    _
  $region37: #{decoder_layer_forward.1} parent=0 // pred_fallthru
    _
  // Predicated region
  $region38: #{decoder_layer_forward.1} parent=0 // pred_check
    _
  $region39: #{decoder_layer_forward.1} parent=0 // pred_check_branch
    %34 = sbr.rel (0) target = $region41
  $region40: #{decoder_layer_forward.1} parent=0 // pred_region
    _
  $region41: #{decoder_layer_forward.1} parent=0 // pred_fallthru
    _
  %p35 = scmp.eq.s32.totalorder 0, 0
  // Predicated region
  $region42: #{decoder_layer_forward.1} parent=0 // pred_check
    %p36 = pneg %p35
  $region43: #{decoder_layer_forward.1} parent=0 // pred_check_branch
    %38 = sbr.rel (%p36) target = $region45
  $region44: #{decoder_layer_forward.1} parent=0 // pred_region
    %v39 = vld [vmem:[%s8] sm:$0x1]
    %v41 = vlaneseq
    %v42 = vshrl.u32 %v41, 7
    %v43 = vsub.s32 0, %v42
    %v44 = vrot.slane %v39, %v43
    %vm46 = vcmask 261120
    %47 = vst.msk [vmem:[#allocation3] sm:$0xff] %vm46, %v44
    %v48 = vld [vmem:[%s9] sm:$0x1]
    %v50 = vlaneseq
    %v51 = vshrl.u32 %v50, 7
    %v52 = vsub.s32 0, %v51
    %v53 = vrot.slane %v48, %v52
    %55 = vst.msk [vmem:[#allocation4] sm:$0xff] %vm46, %v53
  $region45: #{decoder_layer_forward.1} parent=0 // pred_fallthru
    _
  %v56 = vld [vmem:[%s0] sm:$0xff]
  %v57 = vld [vmem:[%s0 + $0x8] sm:$0xff]
  %v58 = vld [vmem:[%s0 + $0x10] sm:$0xff]
  %v59 = vld [vmem:[%s0 + $0x18] sm:$0xff]
  %v60 = vld [vmem:[%s0 + $0x20] sm:$0xff]
  %v61 = vld [vmem:[%s0 + $0x28] sm:$0xff]
  %v62 = vld [vmem:[%s0 + $0x30] sm:$0xff]
  %v63 = vld [vmem:[%s0 + $0x38] sm:$0xff]
  %v64 = vld [vmem:[%s2] sm:$0xff]
  %v65 = vld [vmem:[%s2 + $0x8] sm:$0xff]
  %v66 = vld [vmem:[%s2 + $0x10] sm:$0xff]
  %v67 = vld [vmem:[%s2 + $0x18] sm:$0xff]
  %v68 = vld [vmem:[%s1] sm:$0xff]
  %v69 = vld [vmem:[%s1 + $0x8] sm:$0xff]
  %v70 = vld [vmem:[%s1 + $0x10] sm:$0xff]
  %v71 = vld [vmem:[%s1 + $0x18] sm:$0xff]
  %v72 = vld [vmem:[%s1 + $0x20] sm:$0xff]
  %v73 = vld [vmem:[%s1 + $0x28] sm:$0xff]
  %v74 = vld [vmem:[%s1 + $0x30] sm:$0xff]
  %v75 = vld [vmem:[%s1 + $0x38] sm:$0xff]
  %v76 = vld [vmem:[%s3] sm:$0xff]
  %v77 = vld [vmem:[%s3 + $0x8] sm:$0xff]
  %v78 = vld [vmem:[%s3 + $0x10] sm:$0xff]
  %v79 = vld [vmem:[%s3 + $0x18] sm:$0xff]
  %vm80 = vcmask 261120
  %v82 = vsel %vm80, %v68, 0
  %v85 = vsel %vm80, %v69, 0
  %v88 = vsel %vm80, %v70, 0
  %v91 = vsel %vm80, %v71, 0
  %v94 = vsel %vm80, %v72, 0
  %v97 = vsel %vm80, %v73, 0
  %v100 = vsel %vm80, %v74, 0
  %v103 = vsel %vm80, %v75, 0
  %105 = vmatprep.subr.mxu0 0.0
  %106 = vmatpush1.msra.mxu0 0.0
  %107 = vmatprep.subr.mxu0 0.0
  %108 = vmatpush1.msra.mxu0 0.0
  %109 = vmatprep.subr.mxu0 0.0
  %110 = vmatpush1.msra.mxu0 0.0
  %111 = vmatprep.subr.mxu0 0.0
  %112 = vmatpush1.msra.mxu0 0.0
  %113 = vmatprep.subr.mxu0 0.0
  %114 = vmatpush1.msra.mxu0 0.0
  %115 = vmatprep.subr.mxu0 0.0
  %116 = vmatpush1.msra.mxu0 0.0
  %117 = vmatprep.subr.mxu0 0.0
  %118 = vmatpush1.msra.mxu0 0.0
  %119 = vmatprep.subr.mxu0 0.0
  %120 = vmatpush1.msra.mxu0 0.0
  %121 = vmatprep.subr.mxu0 0.0
  %122 = vmatpush1.msra.mxu0 0.0
  %123 = vmatprep.subr.mxu0 0.0
  %124 = vmatpush1.msra.mxu0 0.0
  %125 = vmatprep.subr.mxu0 0.0
  %126 = vmatpush1.msra.mxu0 0.0
  %127 = vmatprep.subr.mxu0 0.0
  %128 = vmatpush1.msra.mxu0 0.0
  %129 = vmatprep.subr.mxu0 0.0
  %130 = vmatpush1.msra.mxu0 %v79
  %131 = vmatprep.subr.mxu0 0.0
  %132 = vmatpush1.msra.mxu0 %v78
  %133 = vmatprep.subr.mxu0 0.0
  %134 = vmatpush1.msra.mxu0 %v77
  %135 = vmatprep.subr.mxu0 0.0
  %136 = vmatpush1.msra.mxu0 %v76
  %137 = vmatprep.subr.mxu0 0.0
  %138 = vmatpush2.msra.mxu0 0.0
  %139 = vmatprep.subr.mxu0 0.0
  %140 = vmatpush2.msra.mxu0 0.0
  %141 = vmatprep.subr.mxu0 0.0
  %142 = vmatpush2.msra.mxu0 0.0
  %143 = vmatprep.subr.mxu0 0.0
  %144 = vmatpush2.msra.mxu0 0.0
  %145 = vmatprep.subr.mxu0 0.0
  %146 = vmatpush2.msra.mxu0 0.0
  %147 = vmatprep.subr.mxu0 0.0
  %148 = vmatpush2.msra.mxu0 0.0
  %149 = vmatprep.subr.mxu0 0.0
  %150 = vmatpush2.msra.mxu0 0.0
  %151 = vmatprep.subr.mxu0 0.0
  %152 = vmatpush2.msra.mxu0 0.0
  %153 = vmatprep.subr.mxu0 0.0
  %154 = vmatpush2.msra.mxu0 0.0
  %155 = vmatprep.subr.mxu0 0.0
  %156 = vmatpush2.msra.mxu0 0.0
  %157 = vmatprep.subr.mxu0 0.0
  %158 = vmatpush2.msra.mxu0 0.0
  %159 = vmatprep.subr.mxu0 0.0
  %160 = vmatpush2.msra.mxu0 0.0
  %161 = vmatprep.subr.mxu0 0.0
  %162 = vmatpush2.msra.mxu0 0.0
  %163 = vmatprep.subr.mxu0 0.0
  %164 = vmatpush2.msra.mxu0 0.0
  %165 = vmatprep.subr.mxu0 0.0
  %166 = vmatpush2.msra.mxu0 0.0
  %167 = vmatprep.subr.mxu0 0.0
  %168 = vmatpush2.msra.mxu0 0.0
  %169 = vmatprep.mubr.f32.mxu0 0.0
  %170 = vmatmul.mubr.f32.gmra.mxu0 %v82
  %v171 = vpop.f32.mrf.mxu0
  %v172 = vadd.f32 0.0, %v171
  %v173 = vpop.f32.mrf.mxu0
  %174 = vmatprep.mubr.f32.mxu0 0.0
  %175 = vmatmul.mubr.f32.gmra.mxu0 %v85
  %v176 = vpop.f32.mrf.mxu0
  %v177 = vadd.f32 0.0, %v176
  %v178 = vpop.f32.mrf.mxu0
  %179 = vmatprep.mubr.f32.mxu0 0.0
  %180 = vmatmul.mubr.f32.gmra.mxu0 %v88
  %v181 = vpop.f32.mrf.mxu0
  %v182 = vadd.f32 0.0, %v181
  %v183 = vpop.f32.mrf.mxu0
  %184 = vmatprep.mubr.f32.mxu0 0.0
  %185 = vmatmul.mubr.f32.gmra.mxu0 %v91
  %v186 = vpop.f32.mrf.mxu0
  %v187 = vadd.f32 0.0, %v186
  %v188 = vpop.f32.mrf.mxu0
  %189 = vmatprep.mubr.f32.mxu0 0.0
  %190 = vmatmul.mubr.f32.gmra.mxu0 %v94
  %v191 = vpop.f32.mrf.mxu0
  %v192 = vadd.f32 0.0, %v191
  %v193 = vpop.f32.mrf.mxu0
  %194 = vmatprep.mubr.f32.mxu0 0.0
  %195 = vmatmul.mubr.f32.gmra.mxu0 %v97
  %v196 = vpop.f32.mrf.mxu0
  %v197 = vadd.f32 0.0, %v196
  %v198 = vpop.f32.mrf.mxu0
  %199 = vmatprep.mubr.f32.mxu0 0.0
  %200 = vmatmul.mubr.f32.gmra.mxu0 %v100
  %v201 = vpop.f32.mrf.mxu0
  %v202 = vadd.f32 0.0, %v201
  %v203 = vpop.f32.mrf.mxu0
  %204 = vmatprep.mubr.f32.mxu0 0.0
  %205 = vmatmul.mubr.f32.gmra.mxu0 %v103
  %v206 = vpop.f32.mrf.mxu0
  %v207 = vadd.f32 0.0, %v206
  %v208 = vpop.f32.mrf.mxu0
  %209 = vdwg.mxu0
  %v211 = vsel %vm80, %v56, 0
  %v214 = vsel %vm80, %v57, 0
  %v217 = vsel %vm80, %v58, 0
  %v220 = vsel %vm80, %v59, 0
  %v223 = vsel %vm80, %v60, 0
  %v226 = vsel %vm80, %v61, 0
  %v229 = vsel %vm80, %v62, 0
  %v232 = vsel %vm80, %v63, 0
  %234 = vmatprep.subr.mxu0 0.0
  %235 = vmatpush1.msra.mxu0 0.0
  %236 = vmatprep.subr.mxu0 0.0
  %237 = vmatpush1.msra.mxu0 0.0
  %238 = vmatprep.subr.mxu0 0.0
  %239 = vmatpush1.msra.mxu0 0.0
  %240 = vmatprep.subr.mxu0 0.0
  %241 = vmatpush1.msra.mxu0 0.0
  %242 = vmatprep.subr.mxu0 0.0
  %243 = vmatpush1.msra.mxu0 0.0
  %244 = vmatprep.subr.mxu0 0.0
  %245 = vmatpush1.msra.mxu0 0.0
  %246 = vmatprep.subr.mxu0 0.0
  %247 = vmatpush1.msra.mxu0 0.0
  %248 = vmatprep.subr.mxu0 0.0
  %249 = vmatpush1.msra.mxu0 0.0
  %250 = vmatprep.subr.mxu0 0.0
  %251 = vmatpush1.msra.mxu0 0.0
  %252 = vmatprep.subr.mxu0 0.0
  %253 = vmatpush1.msra.mxu0 0.0
  %254 = vmatprep.subr.mxu0 0.0
  %255 = vmatpush1.msra.mxu0 0.0
  %256 = vmatprep.subr.mxu0 0.0
  %257 = vmatpush1.msra.mxu0 0.0
  %258 = vmatprep.subr.mxu0 0.0
  %259 = vmatpush1.msra.mxu0 %v67
  %260 = vmatprep.subr.mxu0 0.0
  %261 = vmatpush1.msra.mxu0 %v66
  %262 = vmatprep.subr.mxu0 0.0
  %263 = vmatpush1.msra.mxu0 %v65
  %264 = vmatprep.subr.mxu0 0.0
  %265 = vmatpush1.msra.mxu0 %v64
  %266 = vmatprep.subr.mxu0 0.0
  %267 = vmatpush2.msra.mxu0 0.0
  %268 = vmatprep.subr.mxu0 0.0
  %269 = vmatpush2.msra.mxu0 0.0
  %270 = vmatprep.subr.mxu0 0.0
  %271 = vmatpush2.msra.mxu0 0.0
  %272 = vmatprep.subr.mxu0 0.0
  %273 = vmatpush2.msra.mxu0 0.0
  %274 = vmatprep.subr.mxu0 0.0
  %275 = vmatpush2.msra.mxu0 0.0
  %276 = vmatprep.subr.mxu0 0.0
  %277 = vmatpush2.msra.mxu0 0.0
  %278 = vmatprep.subr.mxu0 0.0
  %279 = vmatpush2.msra.mxu0 0.0
  %280 = vmatprep.subr.mxu0 0.0
  %281 = vmatpush2.msra.mxu0 0.0
  %282 = vmatprep.subr.mxu0 0.0
  %283 = vmatpush2.msra.mxu0 0.0
  %284 = vmatprep.subr.mxu0 0.0
  %285 = vmatpush2.msra.mxu0 0.0
  %286 = vmatprep.subr.mxu0 0.0
  %287 = vmatpush2.msra.mxu0 0.0
  %288 = vmatprep.subr.mxu0 0.0
  %289 = vmatpush2.msra.mxu0 0.0
  %290 = vmatprep.subr.mxu0 0.0
  %291 = vmatpush2.msra.mxu0 0.0
  %292 = vmatprep.subr.mxu0 0.0
  %293 = vmatpush2.msra.mxu0 0.0
  %294 = vmatprep.subr.mxu0 0.0
  %295 = vmatpush2.msra.mxu0 0.0
  %296 = vmatprep.subr.mxu0 0.0
  %297 = vmatpush2.msra.mxu0 0.0
  %298 = vmatprep.mubr.f32.mxu0 0.0
  %299 = vmatmul.mubr.f32.gmra.mxu0 %v211
  %v300 = vpop.f32.mrf.mxu0
  %v301 = vadd.f32 %v172, %v300
  %v302 = vpop.f32.mrf.mxu0
  %303 = vmatprep.mubr.f32.mxu0 0.0
  %304 = vmatmul.mubr.f32.gmra.mxu0 %v214
  %v305 = vpop.f32.mrf.mxu0
  %v306 = vadd.f32 %v177, %v305
  %v307 = vpop.f32.mrf.mxu0
  %308 = vmatprep.mubr.f32.mxu0 0.0
  %309 = vmatmul.mubr.f32.gmra.mxu0 %v217
  %v310 = vpop.f32.mrf.mxu0
  %v311 = vadd.f32 %v182, %v310
  %v312 = vpop.f32.mrf.mxu0
  %313 = vmatprep.mubr.f32.mxu0 0.0
  %314 = vmatmul.mubr.f32.gmra.mxu0 %v220
  %v315 = vpop.f32.mrf.mxu0
  %v316 = vadd.f32 %v187, %v315
  %v317 = vpop.f32.mrf.mxu0
  %318 = vmatprep.mubr.f32.mxu0 0.0
  %319 = vmatmul.mubr.f32.gmra.mxu0 %v223
  %v320 = vpop.f32.mrf.mxu0
  %v321 = vadd.f32 %v192, %v320
  %v322 = vpop.f32.mrf.mxu0
  %323 = vmatprep.mubr.f32.mxu0 0.0
  %324 = vmatmul.mubr.f32.gmra.mxu0 %v226
  %v325 = vpop.f32.mrf.mxu0
  %v326 = vadd.f32 %v197, %v325
  %v327 = vpop.f32.mrf.mxu0
  %328 = vmatprep.mubr.f32.mxu0 0.0
  %329 = vmatmul.mubr.f32.gmra.mxu0 %v229
  %v330 = vpop.f32.mrf.mxu0
  %v331 = vadd.f32 %v202, %v330
  %v332 = vpop.f32.mrf.mxu0
  %333 = vmatprep.mubr.f32.mxu0 0.0
  %334 = vmatmul.mubr.f32.gmra.mxu0 %v232
  %v335 = vpop.f32.mrf.mxu0
  %v336 = vadd.f32 %v207, %v335
  %v337 = vpop.f32.mrf.mxu0
  %338 = vdwg.mxu0
  %v339 = vld [vmem:[%s5] sm:$0x1]
  %v341 = vlaneseq
  %v342 = vshrl.u32 %v341, 7
  %v343 = vsub.s32 0, %v342
  %v344 = vrot.slane %v339, %v343
  %v346 = vadd.f32 %v301, %v344
  %v347 = vadd.f32 %v306, %v344
  %v348 = vadd.f32 %v311, %v344
  %v349 = vadd.f32 %v316, %v344
  %v350 = vadd.f32 %v321, %v344
  %v351 = vadd.f32 %v326, %v344
  %v352 = vadd.f32 %v331, %v344
  %v353 = vadd.f32 %v336, %v344
  %354 = vst [vmem:[#allocation2] sm:$0xff] %v346
  %355 = vst [vmem:[#allocation2 + $0x8] sm:$0xff] %v347
  %356 = vst [vmem:[#allocation2 + $0x10] sm:$0xff] %v348
  %357 = vst [vmem:[#allocation2 + $0x18] sm:$0xff] %v349
  %358 = vst [vmem:[#allocation2 + $0x20] sm:$0xff] %v350
  %359 = vst [vmem:[#allocation2 + $0x28] sm:$0xff] %v351
  %360 = vst [vmem:[#allocation2 + $0x30] sm:$0xff] %v352
  %361 = vst [vmem:[#allocation2 + $0x38] sm:$0xff] %v353
  %v362 = vld [vmem:[%s4] sm:$0xff]
  %v363 = vld [vmem:[%s4 + $0x8] sm:$0xff]
  %v364 = vld [vmem:[%s4 + $0x10] sm:$0xff]
  %v365 = vld [vmem:[%s4 + $0x18] sm:$0xff]
  %v366 = vld [vmem:[%s6] sm:$0x1]
  %v367 = vld [vmem:[%s7] sm:$0x1]
  %v368 = vlaneseq
  %v369 = vand.u32 %v368, 127
  %vm370 = vcmp.lt.s32.totalorder %v369, 96
  %v371 = vld [vmem:[#allocation3] sm:$0xff]
  %v372 = vld [vmem:[#allocation4] sm:$0xff]
  %v373 = vld [vmem:[#allocation2] sm:$0xff]
  %v375 = vsel %vm80, %v371, 0
  %377 = vmatprep.subr.mxu0 0.0
  %378 = vmatpush1.msra.mxu0 0.0
  %379 = vmatprep.subr.mxu0 0.0
  %380 = vmatpush1.msra.mxu0 0.0
  %381 = vmatprep.subr.mxu0 0.0
  %382 = vmatpush1.msra.mxu0 0.0
  %383 = vmatprep.subr.mxu0 0.0
  %384 = vmatpush1.msra.mxu0 0.0
  %385 = vmatprep.subr.mxu0 0.0
  %386 = vmatpush1.msra.mxu0 0.0
  %387 = vmatprep.subr.mxu0 0.0
  %388 = vmatpush1.msra.mxu0 0.0
  %389 = vmatprep.subr.mxu0 0.0
  %390 = vmatpush1.msra.mxu0 0.0
  %391 = vmatprep.subr.mxu0 0.0
  %392 = vmatpush1.msra.mxu0 0.0
  %393 = vmatprep.subr.mxu0 0.0
  %394 = vmatpush1.msra.mxu0 0.0
  %395 = vmatprep.subr.mxu0 0.0
  %396 = vmatpush1.msra.mxu0 0.0
  %397 = vmatprep.subr.mxu0 0.0
  %398 = vmatpush1.msra.mxu0 0.0
  %399 = vmatprep.subr.mxu0 0.0
  %400 = vmatpush1.msra.mxu0 0.0
  %401 = vmatprep.subr.mxu0 0.0
  %402 = vmatpush1.msra.mxu0 %v365
  %403 = vmatprep.subr.mxu0 0.0
  %404 = vmatpush1.msra.mxu0 %v364
  %405 = vmatprep.subr.mxu0 0.0
  %406 = vmatpush1.msra.mxu0 %v363
  %407 = vmatprep.subr.mxu0 0.0
  %408 = vmatpush1.msra.mxu0 %v362
  %409 = vmatprep.subr.mxu0 0.0
  %410 = vmatpush2.msra.mxu0 0.0
  %411 = vmatprep.subr.mxu0 0.0
  %412 = vmatpush2.msra.mxu0 0.0
  %413 = vmatprep.subr.mxu0 0.0
  %414 = vmatpush2.msra.mxu0 0.0
  %415 = vmatprep.subr.mxu0 0.0
  %416 = vmatpush2.msra.mxu0 0.0
  %417 = vmatprep.subr.mxu0 0.0
  %418 = vmatpush2.msra.mxu0 0.0
  %419 = vmatprep.subr.mxu0 0.0
  %420 = vmatpush2.msra.mxu0 0.0
  %421 = vmatprep.subr.mxu0 0.0
  %422 = vmatpush2.msra.mxu0 0.0
  %423 = vmatprep.subr.mxu0 0.0
  %424 = vmatpush2.msra.mxu0 0.0
  %425 = vmatprep.subr.mxu0 0.0
  %426 = vmatpush2.msra.mxu0 0.0
  %427 = vmatprep.subr.mxu0 0.0
  %428 = vmatpush2.msra.mxu0 0.0
  %429 = vmatprep.subr.mxu0 0.0
  %430 = vmatpush2.msra.mxu0 0.0
  %431 = vmatprep.subr.mxu0 0.0
  %432 = vmatpush2.msra.mxu0 0.0
  %433 = vmatprep.subr.mxu0 0.0
  %434 = vmatpush2.msra.mxu0 0.0
  %435 = vmatprep.subr.mxu0 0.0
  %436 = vmatpush2.msra.mxu0 0.0
  %437 = vmatprep.subr.mxu0 0.0
  %438 = vmatpush2.msra.mxu0 0.0
  %439 = vmatprep.subr.mxu0 0.0
  %440 = vmatpush2.msra.mxu0 0.0
  %441 = vmatprep.mubr.f32.mxu0 0.0
  %442 = vmatmul.mubr.f32.gmra.mxu0 %v375
  %v443 = vpop.f32.mrf.mxu0
  %v444 = vadd.f32 0.0, %v443
  %v445 = vpop.f32.mrf.mxu0
  %446 = vdwg.mxu0
  %v447 = vadd.f32 %v373, %v444
  %448 = vadd.xlane.f32.xlu0 %v447
  %v449 = vpop.xlane.xlu0 %448
  %v450 = vmul.f32 %v449, 0.0078125
  %v451 = vmul.f32 %v447, %v447
  %452 = vadd.xlane.f32.xlu0 %v451
  %v453 = vpop.xlane.xlu0 %452
  %v454 = vmul.f32 %v453, 0.0078125
  %v455 = vmul.f32 %v450, %v450
  %v456 = vsub.f32 %v454, %v455
  %v457 = vsub.f32 %v447, %v450
  %v458 = vadd.f32 %v456, 1e-06
  %v459 = vrsqrt.pop %v458
  %v460 = vmul.f32 %v457, %v459
  %v462 = vlaneseq
  %v463 = vshrl.u32 %v462, 7
  %v464 = vsub.s32 0, %v463
  %v465 = vrot.slane %v366, %v464
  %v467 = vmul.f32 %v460, %v465
  %v469 = vlaneseq
  %v470 = vshrl.u32 %v469, 7
  %v471 = vsub.s32 0, %v470
  %v472 = vrot.slane %v367, %v471
  %v474 = vadd.f32 %v467, %v472
  %v475 = vmul.f32 %v474, 2.0
  %v476 = vsel %vm370, 1, 0
  %vm477 = vcmp.eq.s32.totalorder %v476, 1
  %v478 = vsel %vm477, %v474, %v475
  %v479 = vxor.u32 %v478, 2147483648
  %v480 = vmul.f32 %v479, 1.442695
  %v481 = vpow.pop %v480
  %v482 = vadd.f32 %v481, 1.0
  %v483 = vrcp.pop %v482
  %v484 = vmul.f32 1.0, %v483
  %v485 = vmul.f32 %v484, 2.0
  %v486 = vsub.f32 %v485, 1.0
  %v487 = vsel %vm477, %v484, %v486
  %489 = vrot.lane.b32.xlu0 %v372, 32
  %v490 = vpop.permute.xlu0 %489
  %v492 = vmul.f32 %v487, %v490
  %494 = vrot.lane.b32.xlu0 %v487, 32
  %v495 = vpop.permute.xlu0 %494
  %v497 = vmul.f32 %v487, %v495
  %499 = vrot.lane.b32.xlu0 %v497, 32
  %v500 = vpop.permute.xlu0 %499
  %v502 = vadd.f32 %v492, %v500
  %504 = vrot.lane.b32.xlu0 %v502, 32
  %v505 = vpop.permute.xlu0 %504
  %v507 = vmul.f32 %v487, %v505
  %v508 = vld [vmem:[%s0] sm:$0xff]
  %510 = vrot.lane.b32.xlu0 %v508, 64
  %v511 = vpop.permute.xlu0 %510
  %v513 = vadd.f32 %v507, %v511
  %515 = vrot.lane.b32.xlu0 %v513, 64
  %v516 = vpop.permute.xlu0 %515
  %518 = vst.msk [vmem:[%s10] sm:$0xff] %vm80, %v516
  %s519 = scalar_lea.vmem [#allocation2], 8
  %v520 = vld [vmem:[%s519] sm:$0xff]
  %522 = vrot.lane.b32.xlu0 %v507, 64
  %v523 = vpop.permute.xlu0 %522
  %v524 = vsel %vm80, %v523, 0
  %526 = vmatprep.subr.mxu0 0.0
  %527 = vmatpush1.msra.mxu0 0.0
  %528 = vmatprep.subr.mxu0 0.0
  %529 = vmatpush1.msra.mxu0 0.0
  %530 = vmatprep.subr.mxu0 0.0
  %531 = vmatpush1.msra.mxu0 0.0
  %532 = vmatprep.subr.mxu0 0.0
  %533 = vmatpush1.msra.mxu0 0.0
  %534 = vmatprep.subr.mxu0 0.0
  %535 = vmatpush1.msra.mxu0 0.0
  %536 = vmatprep.subr.mxu0 0.0
  %537 = vmatpush1.msra.mxu0 0.0
  %538 = vmatprep.subr.mxu0 0.0
  %539 = vmatpush1.msra.mxu0 0.0
  %540 = vmatprep.subr.mxu0 0.0
  %541 = vmatpush1.msra.mxu0 0.0
  %542 = vmatprep.subr.mxu0 0.0
  %543 = vmatpush1.msra.mxu0 0.0
  %544 = vmatprep.subr.mxu0 0.0
  %545 = vmatpush1.msra.mxu0 0.0
  %546 = vmatprep.subr.mxu0 0.0
  %547 = vmatpush1.msra.mxu0 0.0
  %548 = vmatprep.subr.mxu0 0.0
  %549 = vmatpush1.msra.mxu0 0.0
  %550 = vmatprep.subr.mxu0 0.0
  %551 = vmatpush1.msra.mxu0 %v365
  %552 = vmatprep.subr.mxu0 0.0
  %553 = vmatpush1.msra.mxu0 %v364
  %554 = vmatprep.subr.mxu0 0.0
  %555 = vmatpush1.msra.mxu0 %v363
  %556 = vmatprep.subr.mxu0 0.0
  %557 = vmatpush1.msra.mxu0 %v362
  %558 = vmatprep.subr.mxu0 0.0
  %559 = vmatpush2.msra.mxu0 0.0
  %560 = vmatprep.subr.mxu0 0.0
  %561 = vmatpush2.msra.mxu0 0.0
  %562 = vmatprep.subr.mxu0 0.0
  %563 = vmatpush2.msra.mxu0 0.0
  %564 = vmatprep.subr.mxu0 0.0
  %565 = vmatpush2.msra.mxu0 0.0
  %566 = vmatprep.subr.mxu0 0.0
  %567 = vmatpush2.msra.mxu0 0.0
  %568 = vmatprep.subr.mxu0 0.0
  %569 = vmatpush2.msra.mxu0 0.0
  %570 = vmatprep.subr.mxu0 0.0
  %571 = vmatpush2.msra.mxu0 0.0
  %572 = vmatprep.subr.mxu0 0.0
  %573 = vmatpush2.msra.mxu0 0.0
  %574 = vmatprep.subr.mxu0 0.0
  %575 = vmatpush2.msra.mxu0 0.0
  %576 = vmatprep.subr.mxu0 0.0
  %577 = vmatpush2.msra.mxu0 0.0
  %578 = vmatprep.subr.mxu0 0.0
  %579 = vmatpush2.msra.mxu0 0.0
  %580 = vmatprep.subr.mxu0 0.0
  %581 = vmatpush2.msra.mxu0 0.0
  %582 = vmatprep.subr.mxu0 0.0
  %583 = vmatpush2.msra.mxu0 0.0
  %584 = vmatprep.subr.mxu0 0.0
  %585 = vmatpush2.msra.mxu0 0.0
  %586 = vmatprep.subr.mxu0 0.0
  %587 = vmatpush2.msra.mxu0 0.0
  %588 = vmatprep.subr.mxu0 0.0
  %589 = vmatpush2.msra.mxu0 0.0
  %590 = vmatprep.mubr.f32.mxu0 0.0
  %591 = vmatmul.mubr.f32.gmra.mxu0 %v524
  %v592 = vpop.f32.mrf.mxu0
  %v593 = vadd.f32 0.0, %v592
  %v594 = vpop.f32.mrf.mxu0
  %595 = vdwg.mxu0
  %v596 = vadd.f32 %v520, %v593
  %597 = vadd.xlane.f32.xlu0 %v596
  %v598 = vpop.xlane.xlu0 %597
  %v599 = vmul.f32 %v598, 0.0078125
  %v600 = vmul.f32 %v596, %v596
  %601 = vadd.xlane.f32.xlu0 %v600
  %v602 = vpop.xlane.xlu0 %601
  %v603 = vmul.f32 %v602, 0.0078125
  %v604 = vmul.f32 %v599, %v599
  %v605 = vsub.f32 %v603, %v604
  %v606 = vsub.f32 %v596, %v599
  %v607 = vadd.f32 %v605, 1e-06
  %v608 = vrsqrt.pop %v607
  %v609 = vmul.f32 %v606, %v608
  %v610 = vmul.f32 %v609, %v465
  %v611 = vadd.f32 %v610, %v472
  %v612 = vmul.f32 %v611, 2.0
  %v613 = vsel %vm477, %v611, %v612
  %v614 = vxor.u32 %v613, 2147483648
  %v615 = vmul.f32 %v614, 1.442695
  %v616 = vpow.pop %v615
  %v617 = vadd.f32 %v616, 1.0
  %v618 = vrcp.pop %v617
  %v619 = vmul.f32 1.0, %v618
  %v620 = vmul.f32 %v619, 2.0
  %v621 = vsub.f32 %v620, 1.0
  %v622 = vsel %vm477, %v619, %v621
  %v623 = vmul.f32 %v622, %v502
  %625 = vrot.lane.b32.xlu0 %v622, 32
  %v626 = vpop.permute.xlu0 %625
  %v628 = vmul.f32 %v622, %v626
  %630 = vrot.lane.b32.xlu0 %v628, 32
  %v631 = vpop.permute.xlu0 %630
  %v633 = vadd.f32 %v623, %v631
  %635 = vrot.lane.b32.xlu0 %v633, 32
  %v636 = vpop.permute.xlu0 %635
  %v638 = vmul.f32 %v622, %v636
  %s639 = scalar_lea.vmem %s0, 8
  %v640 = vld [vmem:[%s639] sm:$0xff]
  %642 = vrot.lane.b32.xlu0 %v640, 64
  %v643 = vpop.permute.xlu0 %642
  %v645 = vadd.f32 %v638, %v643
  %647 = vrot.lane.b32.xlu0 %v645, 64
  %v648 = vpop.permute.xlu0 %647
  %s650 = scalar_lea.vmem %s10, 8
  %651 = vst.msk [vmem:[%s650] sm:$0xff] %vm80, %v648
  %s652 = scalar_lea.vmem [#allocation2], 16
  %v653 = vld [vmem:[%s652] sm:$0xff]
  %655 = vrot.lane.b32.xlu0 %v638, 64
  %v656 = vpop.permute.xlu0 %655
  %v657 = vsel %vm80, %v656, 0
  %659 = vmatprep.subr.mxu0 0.0
  %660 = vmatpush1.msra.mxu0 0.0
  %661 = vmatprep.subr.mxu0 0.0
  %662 = vmatpush1.msra.mxu0 0.0
  %663 = vmatprep.subr.mxu0 0.0
  %664 = vmatpush1.msra.mxu0 0.0
  %665 = vmatprep.subr.mxu0 0.0
  %666 = vmatpush1.msra.mxu0 0.0
  %667 = vmatprep.subr.mxu0 0.0
  %668 = vmatpush1.msra.mxu0 0.0
  %669 = vmatprep.subr.mxu0 0.0
  %670 = vmatpush1.msra.mxu0 0.0
  %671 = vmatprep.subr.mxu0 0.0
  %672 = vmatpush1.msra.mxu0 0.0
  %673 = vmatprep.subr.mxu0 0.0
  %674 = vmatpush1.msra.mxu0 0.0
  %675 = vmatprep.subr.mxu0 0.0
  %676 = vmatpush1.msra.mxu0 0.0
  %677 = vmatprep.subr.mxu0 0.0
  %678 = vmatpush1.msra.mxu0 0.0
  %679 = vmatprep.subr.mxu0 0.0
  %680 = vmatpush1.msra.mxu0 0.0
  %681 = vmatprep.subr.mxu0 0.0
  %682 = vmatpush1.msra.mxu0 0.0
  %683 = vmatprep.subr.mxu0 0.0
  %684 = vmatpush1.msra.mxu0 %v365
  %685 = vmatprep.subr.mxu0 0.0
  %686 = vmatpush1.msra.mxu0 %v364
  %687 = vmatprep.subr.mxu0 0.0
  %688 = vmatpush1.msra.mxu0 %v363
  %689 = vmatprep.subr.mxu0 0.0
  %690 = vmatpush1.msra.mxu0 %v362
  %691 = vmatprep.subr.mxu0 0.0
  %692 = vmatpush2.msra.mxu0 0.0
  %693 = vmatprep.subr.mxu0 0.0
  %694 = vmatpush2.msra.mxu0 0.0
  %695 = vmatprep.subr.mxu0 0.0
  %696 = vmatpush2.msra.mxu0 0.0
  %697 = vmatprep.subr.mxu0 0.0
  %698 = vmatpush2.msra.mxu0 0.0
  %699 = vmatprep.subr.mxu0 0.0
  %700 = vmatpush2.msra.mxu0 0.0
  %701 = vmatprep.subr.mxu0 0.0
  %702 = vmatpush2.msra.mxu0 0.0
  %703 = vmatprep.subr.mxu0 0.0
  %704 = vmatpush2.msra.mxu0 0.0
  %705 = vmatprep.subr.mxu0 0.0
  %706 = vmatpush2.msra.mxu0 0.0
  %707 = vmatprep.subr.mxu0 0.0
  %708 = vmatpush2.msra.mxu0 0.0
  %709 = vmatprep.subr.mxu0 0.0
  %710 = vmatpush2.msra.mxu0 0.0
  %711 = vmatprep.subr.mxu0 0.0
  %712 = vmatpush2.msra.mxu0 0.0
  %713 = vmatprep.subr.mxu0 0.0
  %714 = vmatpush2.msra.mxu0 0.0
  %715 = vmatprep.subr.mxu0 0.0
  %716 = vmatpush2.msra.mxu0 0.0
  %717 = vmatprep.subr.mxu0 0.0
  %718 = vmatpush2.msra.mxu0 0.0
  %719 = vmatprep.subr.mxu0 0.0
  %720 = vmatpush2.msra.mxu0 0.0
  %721 = vmatprep.subr.mxu0 0.0
  %722 = vmatpush2.msra.mxu0 0.0
  %723 = vmatprep.mubr.f32.mxu0 0.0
  %724 = vmatmul.mubr.f32.gmra.mxu0 %v657
  %v725 = vpop.f32.mrf.mxu0
  %v726 = vadd.f32 0.0, %v725
  %v727 = vpop.f32.mrf.mxu0
  %728 = vdwg.mxu0
  %v729 = vadd.f32 %v653, %v726
  %730 = vadd.xlane.f32.xlu0 %v729
  %v731 = vpop.xlane.xlu0 %730
  %v732 = vmul.f32 %v731, 0.0078125
  %v733 = vmul.f32 %v729, %v729
  %734 = vadd.xlane.f32.xlu0 %v733
  %v735 = vpop.xlane.xlu0 %734
  %v736 = vmul.f32 %v735, 0.0078125
  %v737 = vmul.f32 %v732, %v732
  %v738 = vsub.f32 %v736, %v737
  %v739 = vsub.f32 %v729, %v732
  %v740 = vadd.f32 %v738, 1e-06
  %v741 = vrsqrt.pop %v740
  %v742 = vmul.f32 %v739, %v741
  %v743 = vmul.f32 %v742, %v465
  %v744 = vadd.f32 %v743, %v472
  %v745 = vmul.f32 %v744, 2.0
  %v746 = vsel %vm477, %v744, %v745
  %v747 = vxor.u32 %v746, 2147483648
  %v748 = vmul.f32 %v747, 1.442695
  %v749 = vpow.pop %v748
  %v750 = vadd.f32 %v749, 1.0
  %v751 = vrcp.pop %v750
  %v752 = vmul.f32 1.0, %v751
  %v753 = vmul.f32 %v752, 2.0
  %v754 = vsub.f32 %v753, 1.0
  %v755 = vsel %vm477, %v752, %v754
  %v756 = vmul.f32 %v755, %v633
  %758 = vrot.lane.b32.xlu0 %v755, 32
  %v759 = vpop.permute.xlu0 %758
  %v761 = vmul.f32 %v755, %v759
  %763 = vrot.lane.b32.xlu0 %v761, 32
  %v764 = vpop.permute.xlu0 %763
  %v766 = vadd.f32 %v756, %v764
  %768 = vrot.lane.b32.xlu0 %v766, 32
  %v769 = vpop.permute.xlu0 %768
  %v771 = vmul.f32 %v755, %v769
  %s772 = scalar_lea.vmem %s0, 16
  %v773 = vld [vmem:[%s772] sm:$0xff]
  %775 = vrot.lane.b32.xlu0 %v773, 64
  %v776 = vpop.permute.xlu0 %775
  %v778 = vadd.f32 %v771, %v776
  %780 = vrot.lane.b32.xlu0 %v778, 64
  %v781 = vpop.permute.xlu0 %780
  %s783 = scalar_lea.vmem %s10, 16
  %784 = vst.msk [vmem:[%s783] sm:$0xff] %vm80, %v781
  %s785 = scalar_lea.vmem [#allocation2], 24
  %v786 = vld [vmem:[%s785] sm:$0xff]
  %788 = vrot.lane.b32.xlu0 %v771, 64
  %v789 = vpop.permute.xlu0 %788
  %v790 = vsel %vm80, %v789, 0
  %792 = vmatprep.subr.mxu0 0.0
  %793 = vmatpush1.msra.mxu0 0.0
  %794 = vmatprep.subr.mxu0 0.0
  %795 = vmatpush1.msra.mxu0 0.0
  %796 = vmatprep.subr.mxu0 0.0
  %797 = vmatpush1.msra.mxu0 0.0
  %798 = vmatprep.subr.mxu0 0.0
  %799 = vmatpush1.msra.mxu0 0.0
  %800 = vmatprep.subr.mxu0 0.0
  %801 = vmatpush1.msra.mxu0 0.0
  %802 = vmatprep.subr.mxu0 0.0
  %803 = vmatpush1.msra.mxu0 0.0
  %804 = vmatprep.subr.mxu0 0.0
  %805 = vmatpush1.msra.mxu0 0.0
  %806 = vmatprep.subr.mxu0 0.0
  %807 = vmatpush1.msra.mxu0 0.0
  %808 = vmatprep.subr.mxu0 0.0
  %809 = vmatpush1.msra.mxu0 0.0
  %810 = vmatprep.subr.mxu0 0.0
  %811 = vmatpush1.msra.mxu0 0.0
  %812 = vmatprep.subr.mxu0 0.0
  %813 = vmatpush1.msra.mxu0 0.0
  %814 = vmatprep.subr.mxu0 0.0
  %815 = vmatpush1.msra.mxu0 0.0
  %816 = vmatprep.subr.mxu0 0.0
  %817 = vmatpush1.msra.mxu0 %v365
  %818 = vmatprep.subr.mxu0 0.0
  %819 = vmatpush1.msra.mxu0 %v364
  %820 = vmatprep.subr.mxu0 0.0
  %821 = vmatpush1.msra.mxu0 %v363
  %822 = vmatprep.subr.mxu0 0.0
  %823 = vmatpush1.msra.mxu0 %v362
  %824 = vmatprep.subr.mxu0 0.0
  %825 = vmatpush2.msra.mxu0 0.0
  %826 = vmatprep.subr.mxu0 0.0
  %827 = vmatpush2.msra.mxu0 0.0
  %828 = vmatprep.subr.mxu0 0.0
  %829 = vmatpush2.msra.mxu0 0.0
  %830 = vmatprep.subr.mxu0 0.0
  %831 = vmatpush2.msra.mxu0 0.0
  %832 = vmatprep.subr.mxu0 0.0
  %833 = vmatpush2.msra.mxu0 0.0
  %834 = vmatprep.subr.mxu0 0.0
  %835 = vmatpush2.msra.mxu0 0.0
  %836 = vmatprep.subr.mxu0 0.0
  %837 = vmatpush2.msra.mxu0 0.0
  %838 = vmatprep.subr.mxu0 0.0
  %839 = vmatpush2.msra.mxu0 0.0
  %840 = vmatprep.subr.mxu0 0.0
  %841 = vmatpush2.msra.mxu0 0.0
  %842 = vmatprep.subr.mxu0 0.0
  %843 = vmatpush2.msra.mxu0 0.0
  %844 = vmatprep.subr.mxu0 0.0
  %845 = vmatpush2.msra.mxu0 0.0
  %846 = vmatprep.subr.mxu0 0.0
  %847 = vmatpush2.msra.mxu0 0.0
  %848 = vmatprep.subr.mxu0 0.0
  %849 = vmatpush2.msra.mxu0 0.0
  %850 = vmatprep.subr.mxu0 0.0
  %851 = vmatpush2.msra.mxu0 0.0
  %852 = vmatprep.subr.mxu0 0.0
  %853 = vmatpush2.msra.mxu0 0.0
  %854 = vmatprep.subr.mxu0 0.0
  %855 = vmatpush2.msra.mxu0 0.0
  %856 = vmatprep.mubr.f32.mxu0 0.0
  %857 = vmatmul.mubr.f32.gmra.mxu0 %v790
  %v858 = vpop.f32.mrf.mxu0
  %v859 = vadd.f32 0.0, %v858
  %v860 = vpop.f32.mrf.mxu0
  %861 = vdwg.mxu0
  %v862 = vadd.f32 %v786, %v859
  %863 = vadd.xlane.f32.xlu0 %v862
  %v864 = vpop.xlane.xlu0 %863
  %v865 = vmul.f32 %v864, 0.0078125
  %v866 = vmul.f32 %v862, %v862
  %867 = vadd.xlane.f32.xlu0 %v866
  %v868 = vpop.xlane.xlu0 %867
  %v869 = vmul.f32 %v868, 0.0078125
  %v870 = vmul.f32 %v865, %v865
  %v871 = vsub.f32 %v869, %v870
  %v872 = vsub.f32 %v862, %v865
  %v873 = vadd.f32 %v871, 1e-06
  %v874 = vrsqrt.pop %v873
  %v875 = vmul.f32 %v872, %v874
  %v876 = vmul.f32 %v875, %v465
  %v877 = vadd.f32 %v876, %v472
  %v878 = vmul.f32 %v877, 2.0
  %v879 = vsel %vm477, %v877, %v878
  %v880 = vxor.u32 %v879, 2147483648
  %v881 = vmul.f32 %v880, 1.442695
  %v882 = vpow.pop %v881
  %v883 = vadd.f32 %v882, 1.0
  %v884 = vrcp.pop %v883
  %v885 = vmul.f32 1.0, %v884
  %v886 = vmul.f32 %v885, 2.0
  %v887 = vsub.f32 %v886, 1.0
  %v888 = vsel %vm477, %v885, %v887
  %v889 = vmul.f32 %v888, %v766
  %891 = vrot.lane.b32.xlu0 %v888, 32
  %v892 = vpop.permute.xlu0 %891
  %v894 = vmul.f32 %v888, %v892
  %896 = vrot.lane.b32.xlu0 %v894, 32
  %v897 = vpop.permute.xlu0 %896
  %v899 = vadd.f32 %v889, %v897
  %901 = vrot.lane.b32.xlu0 %v899, 32
  %v902 = vpop.permute.xlu0 %901
  %v904 = vmul.f32 %v888, %v902
  %s905 = scalar_lea.vmem %s0, 24
  %v906 = vld [vmem:[%s905] sm:$0xff]
  %908 = vrot.lane.b32.xlu0 %v906, 64
  %v909 = vpop.permute.xlu0 %908
  %v911 = vadd.f32 %v904, %v909
  %913 = vrot.lane.b32.xlu0 %v911, 64
  %v914 = vpop.permute.xlu0 %913
  %s916 = scalar_lea.vmem %s10, 24
  %917 = vst.msk [vmem:[%s916] sm:$0xff] %vm80, %v914
  %s918 = scalar_lea.vmem [#allocation2], 32
  %v919 = vld [vmem:[%s918] sm:$0xff]
  %921 = vrot.lane.b32.xlu0 %v904, 64
  %v922 = vpop.permute.xlu0 %921
  %v923 = vsel %vm80, %v922, 0
  %925 = vmatprep.subr.mxu0 0.0
  %926 = vmatpush1.msra.mxu0 0.0
  %927 = vmatprep.subr.mxu0 0.0
  %928 = vmatpush1.msra.mxu0 0.0
  %929 = vmatprep.subr.mxu0 0.0
  %930 = vmatpush1.msra.mxu0 0.0
  %931 = vmatprep.subr.mxu0 0.0
  %932 = vmatpush1.msra.mxu0 0.0
  %933 = vmatprep.subr.mxu0 0.0
  %934 = vmatpush1.msra.mxu0 0.0
  %935 = vmatprep.subr.mxu0 0.0
  %936 = vmatpush1.msra.mxu0 0.0
  %937 = vmatprep.subr.mxu0 0.0
  %938 = vmatpush1.msra.mxu0 0.0
  %939 = vmatprep.subr.mxu0 0.0
  %940 = vmatpush1.msra.mxu0 0.0
  %941 = vmatprep.subr.mxu0 0.0
  %942 = vmatpush1.msra.mxu0 0.0
  %943 = vmatprep.subr.mxu0 0.0
  %944 = vmatpush1.msra.mxu0 0.0
  %945 = vmatprep.subr.mxu0 0.0
  %946 = vmatpush1.msra.mxu0 0.0
  %947 = vmatprep.subr.mxu0 0.0
  %948 = vmatpush1.msra.mxu0 0.0
  %949 = vmatprep.subr.mxu0 0.0
  %950 = vmatpush1.msra.mxu0 %v365
  %951 = vmatprep.subr.mxu0 0.0
  %952 = vmatpush1.msra.mxu0 %v364
  %953 = vmatprep.subr.mxu0 0.0
  %954 = vmatpush1.msra.mxu0 %v363
  %955 = vmatprep.subr.mxu0 0.0
  %956 = vmatpush1.msra.mxu0 %v362
  %957 = vmatprep.subr.mxu0 0.0
  %958 = vmatpush2.msra.mxu0 0.0
  %959 = vmatprep.subr.mxu0 0.0
  %960 = vmatpush2.msra.mxu0 0.0
  %961 = vmatprep.subr.mxu0 0.0
  %962 = vmatpush2.msra.mxu0 0.0
  %963 = vmatprep.subr.mxu0 0.0
  %964 = vmatpush2.msra.mxu0 0.0
  %965 = vmatprep.subr.mxu0 0.0
  %966 = vmatpush2.msra.mxu0 0.0
  %967 = vmatprep.subr.mxu0 0.0
  %968 = vmatpush2.msra.mxu0 0.0
  %969 = vmatprep.subr.mxu0 0.0
  %970 = vmatpush2.msra.mxu0 0.0
  %971 = vmatprep.subr.mxu0 0.0
  %972 = vmatpush2.msra.mxu0 0.0
  %973 = vmatprep.subr.mxu0 0.0
  %974 = vmatpush2.msra.mxu0 0.0
  %975 = vmatprep.subr.mxu0 0.0
  %976 = vmatpush2.msra.mxu0 0.0
  %977 = vmatprep.subr.mxu0 0.0
  %978 = vmatpush2.msra.mxu0 0.0
  %979 = vmatprep.subr.mxu0 0.0
  %980 = vmatpush2.msra.mxu0 0.0
  %981 = vmatprep.subr.mxu0 0.0
  %982 = vmatpush2.msra.mxu0 0.0
  %983 = vmatprep.subr.mxu0 0.0
  %984 = vmatpush2.msra.mxu0 0.0
  %985 = vmatprep.subr.mxu0 0.0
  %986 = vmatpush2.msra.mxu0 0.0
  %987 = vmatprep.subr.mxu0 0.0
  %988 = vmatpush2.msra.mxu0 0.0
  %989 = vmatprep.mubr.f32.mxu0 0.0
  %990 = vmatmul.mubr.f32.gmra.mxu0 %v923
  %v991 = vpop.f32.mrf.mxu0
  %v992 = vadd.f32 0.0, %v991
  %v993 = vpop.f32.mrf.mxu0
  %994 = vdwg.mxu0
  %v995 = vadd.f32 %v919, %v992
  %996 = vadd.xlane.f32.xlu0 %v995
  %v997 = vpop.xlane.xlu0 %996
  %v998 = vmul.f32 %v997, 0.0078125
  %v999 = vmul.f32 %v995, %v995
  %1000 = vadd.xlane.f32.xlu0 %v999
  %v1001 = vpop.xlane.xlu0 %1000
  %v1002 = vmul.f32 %v1001, 0.0078125
  %v1003 = vmul.f32 %v998, %v998
  %v1004 = vsub.f32 %v1002, %v1003
  %v1005 = vsub.f32 %v995, %v998
  %v1006 = vadd.f32 %v1004, 1e-06
  %v1007 = vrsqrt.pop %v1006
  %v1008 = vmul.f32 %v1005, %v1007
  %v1009 = vmul.f32 %v1008, %v465
  %v1010 = vadd.f32 %v1009, %v472
  %v1011 = vmul.f32 %v1010, 2.0
  %v1012 = vsel %vm477, %v1010, %v1011
  %v1013 = vxor.u32 %v1012, 2147483648
  %v1014 = vmul.f32 %v1013, 1.442695
  %v1015 = vpow.pop %v1014
  %v1016 = vadd.f32 %v1015, 1.0
  %v1017 = vrcp.pop %v1016
  %v1018 = vmul.f32 1.0, %v1017
  %v1019 = vmul.f32 %v1018, 2.0
  %v1020 = vsub.f32 %v1019, 1.0
  %v1021 = vsel %vm477, %v1018, %v1020
  %v1022 = vmul.f32 %v1021, %v899
  %1024 = vrot.lane.b32.xlu0 %v1021, 32
  %v1025 = vpop.permute.xlu0 %1024
  %v1027 = vmul.f32 %v1021, %v1025
  %1029 = vrot.lane.b32.xlu0 %v1027, 32
  %v1030 = vpop.permute.xlu0 %1029
  %v1032 = vadd.f32 %v1022, %v1030
  %1034 = vrot.lane.b32.xlu0 %v1032, 32
  %v1035 = vpop.permute.xlu0 %1034
  %v1037 = vmul.f32 %v1021, %v1035
  %s1038 = scalar_lea.vmem %s0, 32
  %v1039 = vld [vmem:[%s1038] sm:$0xff]
  %1041 = vrot.lane.b32.xlu0 %v1039, 64
  %v1042 = vpop.permute.xlu0 %1041
  %v1044 = vadd.f32 %v1037, %v1042
  %1046 = vrot.lane.b32.xlu0 %v1044, 64
  %v1047 = vpop.permute.xlu0 %1046
  %s1049 = scalar_lea.vmem %s10, 32
  %1050 = vst.msk [vmem:[%s1049] sm:$0xff] %vm80, %v1047
  %s1051 = scalar_lea.vmem [#allocation2], 40
  %v1052 = vld [vmem:[%s1051] sm:$0xff]
  %1054 = vrot.lane.b32.xlu0 %v1037, 64
  %v1055 = vpop.permute.xlu0 %1054
  %v1056 = vsel %vm80, %v1055, 0
  %1058 = vmatprep.subr.mxu0 0.0
  %1059 = vmatpush1.msra.mxu0 0.0
  %1060 = vmatprep.subr.mxu0 0.0
  %1061 = vmatpush1.msra.mxu0 0.0
  %1062 = vmatprep.subr.mxu0 0.0
  %1063 = vmatpush1.msra.mxu0 0.0
  %1064 = vmatprep.subr.mxu0 0.0
  %1065 = vmatpush1.msra.mxu0 0.0
  %1066 = vmatprep.subr.mxu0 0.0
  %1067 = vmatpush1.msra.mxu0 0.0
  %1068 = vmatprep.subr.mxu0 0.0
  %1069 = vmatpush1.msra.mxu0 0.0
  %1070 = vmatprep.subr.mxu0 0.0
  %1071 = vmatpush1.msra.mxu0 0.0
  %1072 = vmatprep.subr.mxu0 0.0
  %1073 = vmatpush1.msra.mxu0 0.0
  %1074 = vmatprep.subr.mxu0 0.0
  %1075 = vmatpush1.msra.mxu0 0.0
  %1076 = vmatprep.subr.mxu0 0.0
  %1077 = vmatpush1.msra.mxu0 0.0
  %1078 = vmatprep.subr.mxu0 0.0
  %1079 = vmatpush1.msra.mxu0 0.0
  %1080 = vmatprep.subr.mxu0 0.0
  %1081 = vmatpush1.msra.mxu0 0.0
  %1082 = vmatprep.subr.mxu0 0.0
  %1083 = vmatpush1.msra.mxu0 %v365
  %1084 = vmatprep.subr.mxu0 0.0
  %1085 = vmatpush1.msra.mxu0 %v364
  %1086 = vmatprep.subr.mxu0 0.0
  %1087 = vmatpush1.msra.mxu0 %v363
  %1088 = vmatprep.subr.mxu0 0.0
  %1089 = vmatpush1.msra.mxu0 %v362
  %1090 = vmatprep.subr.mxu0 0.0
  %1091 = vmatpush2.msra.mxu0 0.0
  %1092 = vmatprep.subr.mxu0 0.0
  %1093 = vmatpush2.msra.mxu0 0.0
  %1094 = vmatprep.subr.mxu0 0.0
  %1095 = vmatpush2.msra.mxu0 0.0
  %1096 = vmatprep.subr.mxu0 0.0
  %1097 = vmatpush2.msra.mxu0 0.0
  %1098 = vmatprep.subr.mxu0 0.0
  %1099 = vmatpush2.msra.mxu0 0.0
  %1100 = vmatprep.subr.mxu0 0.0
  %1101 = vmatpush2.msra.mxu0 0.0
  %1102 = vmatprep.subr.mxu0 0.0
  %1103 = vmatpush2.msra.mxu0 0.0
  %1104 = vmatprep.subr.mxu0 0.0
  %1105 = vmatpush2.msra.mxu0 0.0
  %1106 = vmatprep.subr.mxu0 0.0
  %1107 = vmatpush2.msra.mxu0 0.0
  %1108 = vmatprep.subr.mxu0 0.0
  %1109 = vmatpush2.msra.mxu0 0.0
  %1110 = vmatprep.subr.mxu0 0.0
  %1111 = vmatpush2.msra.mxu0 0.0
  %1112 = vmatprep.subr.mxu0 0.0
  %1113 = vmatpush2.msra.mxu0 0.0
  %1114 = vmatprep.subr.mxu0 0.0
  %1115 = vmatpush2.msra.mxu0 0.0
  %1116 = vmatprep.subr.mxu0 0.0
  %1117 = vmatpush2.msra.mxu0 0.0
  %1118 = vmatprep.subr.mxu0 0.0
  %1119 = vmatpush2.msra.mxu0 0.0
  %1120 = vmatprep.subr.mxu0 0.0
  %1121 = vmatpush2.msra.mxu0 0.0
  %1122 = vmatprep.mubr.f32.mxu0 0.0
  %1123 = vmatmul.mubr.f32.gmra.mxu0 %v1056
  %v1124 = vpop.f32.mrf.mxu0
  %v1125 = vadd.f32 0.0, %v1124
  %v1126 = vpop.f32.mrf.mxu0
  %1127 = vdwg.mxu0
  %v1128 = vadd.f32 %v1052, %v1125
  %1129 = vadd.xlane.f32.xlu0 %v1128
  %v1130 = vpop.xlane.xlu0 %1129
  %v1131 = vmul.f32 %v1130, 0.0078125
  %v1132 = vmul.f32 %v1128, %v1128
  %1133 = vadd.xlane.f32.xlu0 %v1132
  %v1134 = vpop.xlane.xlu0 %1133
  %v1135 = vmul.f32 %v1134, 0.0078125
  %v1136 = vmul.f32 %v1131, %v1131
  %v1137 = vsub.f32 %v1135, %v1136
  %v1138 = vsub.f32 %v1128, %v1131
  %v1139 = vadd.f32 %v1137, 1e-06
  %v1140 = vrsqrt.pop %v1139
  %v1141 = vmul.f32 %v1138, %v1140
  %v1142 = vmul.f32 %v1141, %v465
  %v1143 = vadd.f32 %v1142, %v472
  %v1144 = vmul.f32 %v1143, 2.0
  %v1145 = vsel %vm477, %v1143, %v1144
  %v1146 = vxor.u32 %v1145, 2147483648
  %v1147 = vmul.f32 %v1146, 1.442695
  %v1148 = vpow.pop %v1147
  %v1149 = vadd.f32 %v1148, 1.0
  %v1150 = vrcp.pop %v1149
  %v1151 = vmul.f32 1.0, %v1150
  %v1152 = vmul.f32 %v1151, 2.0
  %v1153 = vsub.f32 %v1152, 1.0
  %v1154 = vsel %vm477, %v1151, %v1153
  %v1155 = vmul.f32 %v1154, %v1032
  %1157 = vrot.lane.b32.xlu0 %v1154, 32
  %v1158 = vpop.permute.xlu0 %1157
  %v1160 = vmul.f32 %v1154, %v1158
  %1162 = vrot.lane.b32.xlu0 %v1160, 32
  %v1163 = vpop.permute.xlu0 %1162
  %v1165 = vadd.f32 %v1155, %v1163
  %1167 = vrot.lane.b32.xlu0 %v1165, 32
  %v1168 = vpop.permute.xlu0 %1167
  %v1170 = vmul.f32 %v1154, %v1168
  %s1171 = scalar_lea.vmem %s0, 40
  %v1172 = vld [vmem:[%s1171] sm:$0xff]
  %1174 = vrot.lane.b32.xlu0 %v1172, 64
  %v1175 = vpop.permute.xlu0 %1174
  %v1177 = vadd.f32 %v1170, %v1175
  %1179 = vrot.lane.b32.xlu0 %v1177, 64
  %v1180 = vpop.permute.xlu0 %1179
  %s1182 = scalar_lea.vmem %s10, 40
  %1183 = vst.msk [vmem:[%s1182] sm:$0xff] %vm80, %v1180
  %s1184 = scalar_lea.vmem [#allocation2], 48
  %v1185 = vld [vmem:[%s1184] sm:$0xff]
  %1187 = vrot.lane.b32.xlu0 %v1170, 64
  %v1188 = vpop.permute.xlu0 %1187
  %v1189 = vsel %vm80, %v1188, 0
  %1191 = vmatprep.subr.mxu0 0.0
  %1192 = vmatpush1.msra.mxu0 0.0
  %1193 = vmatprep.subr.mxu0 0.0
  %1194 = vmatpush1.msra.mxu0 0.0
  %1195 = vmatprep.subr.mxu0 0.0
  %1196 = vmatpush1.msra.mxu0 0.0
  %1197 = vmatprep.subr.mxu0 0.0
  %1198 = vmatpush1.msra.mxu0 0.0
  %1199 = vmatprep.subr.mxu0 0.0
  %1200 = vmatpush1.msra.mxu0 0.0
  %1201 = vmatprep.subr.mxu0 0.0
  %1202 = vmatpush1.msra.mxu0 0.0
  %1203 = vmatprep.subr.mxu0 0.0
  %1204 = vmatpush1.msra.mxu0 0.0
  %1205 = vmatprep.subr.mxu0 0.0
  %1206 = vmatpush1.msra.mxu0 0.0
  %1207 = vmatprep.subr.mxu0 0.0
  %1208 = vmatpush1.msra.mxu0 0.0
  %1209 = vmatprep.subr.mxu0 0.0
  %1210 = vmatpush1.msra.mxu0 0.0
  %1211 = vmatprep.subr.mxu0 0.0
  %1212 = vmatpush1.msra.mxu0 0.0
  %1213 = vmatprep.subr.mxu0 0.0
  %1214 = vmatpush1.msra.mxu0 0.0
  %1215 = vmatprep.subr.mxu0 0.0
  %1216 = vmatpush1.msra.mxu0 %v365
  %1217 = vmatprep.subr.mxu0 0.0
  %1218 = vmatpush1.msra.mxu0 %v364
  %1219 = vmatprep.subr.mxu0 0.0
  %1220 = vmatpush1.msra.mxu0 %v363
  %1221 = vmatprep.subr.mxu0 0.0
  %1222 = vmatpush1.msra.mxu0 %v362
  %1223 = vmatprep.subr.mxu0 0.0
  %1224 = vmatpush2.msra.mxu0 0.0
  %1225 = vmatprep.subr.mxu0 0.0
  %1226 = vmatpush2.msra.mxu0 0.0
  %1227 = vmatprep.subr.mxu0 0.0
  %1228 = vmatpush2.msra.mxu0 0.0
  %1229 = vmatprep.subr.mxu0 0.0
  %1230 = vmatpush2.msra.mxu0 0.0
  %1231 = vmatprep.subr.mxu0 0.0
  %1232 = vmatpush2.msra.mxu0 0.0
  %1233 = vmatprep.subr.mxu0 0.0
  %1234 = vmatpush2.msra.mxu0 0.0
  %1235 = vmatprep.subr.mxu0 0.0
  %1236 = vmatpush2.msra.mxu0 0.0
  %1237 = vmatprep.subr.mxu0 0.0
  %1238 = vmatpush2.msra.mxu0 0.0
  %1239 = vmatprep.subr.mxu0 0.0
  %1240 = vmatpush2.msra.mxu0 0.0
  %1241 = vmatprep.subr.mxu0 0.0
  %1242 = vmatpush2.msra.mxu0 0.0
  %1243 = vmatprep.subr.mxu0 0.0
  %1244 = vmatpush2.msra.mxu0 0.0
  %1245 = vmatprep.subr.mxu0 0.0
  %1246 = vmatpush2.msra.mxu0 0.0
  %1247 = vmatprep.subr.mxu0 0.0
  %1248 = vmatpush2.msra.mxu0 0.0
  %1249 = vmatprep.subr.mxu0 0.0
  %1250 = vmatpush2.msra.mxu0 0.0
  %1251 = vmatprep.subr.mxu0 0.0
  %1252 = vmatpush2.msra.mxu0 0.0
  %1253 = vmatprep.subr.mxu0 0.0
  %1254 = vmatpush2.msra.mxu0 0.0
  %1255 = vmatprep.mubr.f32.mxu0 0.0
  %1256 = vmatmul.mubr.f32.gmra.mxu0 %v1189
  %v1257 = vpop.f32.mrf.mxu0
  %v1258 = vadd.f32 0.0, %v1257
  %v1259 = vpop.f32.mrf.mxu0
  %1260 = vdwg.mxu0
  %v1261 = vadd.f32 %v1185, %v1258
  %1262 = vadd.xlane.f32.xlu0 %v1261
  %v1263 = vpop.xlane.xlu0 %1262
  %v1264 = vmul.f32 %v1263, 0.0078125
  %v1265 = vmul.f32 %v1261, %v1261
  %1266 = vadd.xlane.f32.xlu0 %v1265
  %v1267 = vpop.xlane.xlu0 %1266
  %v1268 = vmul.f32 %v1267, 0.0078125
  %v1269 = vmul.f32 %v1264, %v1264
  %v1270 = vsub.f32 %v1268, %v1269
  %v1271 = vsub.f32 %v1261, %v1264
  %v1272 = vadd.f32 %v1270, 1e-06
  %v1273 = vrsqrt.pop %v1272
  %v1274 = vmul.f32 %v1271, %v1273
  %v1275 = vmul.f32 %v1274, %v465
  %v1276 = vadd.f32 %v1275, %v472
  %v1277 = vmul.f32 %v1276, 2.0
  %v1278 = vsel %vm477, %v1276, %v1277
  %v1279 = vxor.u32 %v1278, 2147483648
  %v1280 = vmul.f32 %v1279, 1.442695
  %v1281 = vpow.pop %v1280
  %v1282 = vadd.f32 %v1281, 1.0
  %v1283 = vrcp.pop %v1282
  %v1284 = vmul.f32 1.0, %v1283
  %v1285 = vmul.f32 %v1284, 2.0
  %v1286 = vsub.f32 %v1285, 1.0
  %v1287 = vsel %vm477, %v1284, %v1286
  %v1288 = vmul.f32 %v1287, %v1165
  %1290 = vrot.lane.b32.xlu0 %v1287, 32
  %v1291 = vpop.permute.xlu0 %1290
  %v1293 = vmul.f32 %v1287, %v1291
  %1295 = vrot.lane.b32.xlu0 %v1293, 32
  %v1296 = vpop.permute.xlu0 %1295
  %v1298 = vadd.f32 %v1288, %v1296
  %1300 = vrot.lane.b32.xlu0 %v1298, 32
  %v1301 = vpop.permute.xlu0 %1300
  %v1303 = vmul.f32 %v1287, %v1301
  %s1304 = scalar_lea.vmem %s0, 48
  %v1305 = vld [vmem:[%s1304] sm:$0xff]
  %1307 = vrot.lane.b32.xlu0 %v1305, 64
  %v1308 = vpop.permute.xlu0 %1307
  %v1310 = vadd.f32 %v1303, %v1308
  %1312 = vrot.lane.b32.xlu0 %v1310, 64
  %v1313 = vpop.permute.xlu0 %1312
  %s1315 = scalar_lea.vmem %s10, 48
  %1316 = vst.msk [vmem:[%s1315] sm:$0xff] %vm80, %v1313
  %s1317 = scalar_lea.vmem [#allocation2], 56
  %v1318 = vld [vmem:[%s1317] sm:$0xff]
  %1320 = vrot.lane.b32.xlu0 %v1303, 64
  %v1321 = vpop.permute.xlu0 %1320
  %v1322 = vsel %vm80, %v1321, 0
  %1324 = vmatprep.subr.mxu0 0.0
  %1325 = vmatpush1.msra.mxu0 0.0
  %1326 = vmatprep.subr.mxu0 0.0
  %1327 = vmatpush1.msra.mxu0 0.0
  %1328 = vmatprep.subr.mxu0 0.0
  %1329 = vmatpush1.msra.mxu0 0.0
  %1330 = vmatprep.subr.mxu0 0.0
  %1331 = vmatpush1.msra.mxu0 0.0
  %1332 = vmatprep.subr.mxu0 0.0
  %1333 = vmatpush1.msra.mxu0 0.0
  %1334 = vmatprep.subr.mxu0 0.0
  %1335 = vmatpush1.msra.mxu0 0.0
  %1336 = vmatprep.subr.mxu0 0.0
  %1337 = vmatpush1.msra.mxu0 0.0
  %1338 = vmatprep.subr.mxu0 0.0
  %1339 = vmatpush1.msra.mxu0 0.0
  %1340 = vmatprep.subr.mxu0 0.0
  %1341 = vmatpush1.msra.mxu0 0.0
  %1342 = vmatprep.subr.mxu0 0.0
  %1343 = vmatpush1.msra.mxu0 0.0
  %1344 = vmatprep.subr.mxu0 0.0
  %1345 = vmatpush1.msra.mxu0 0.0
  %1346 = vmatprep.subr.mxu0 0.0
  %1347 = vmatpush1.msra.mxu0 0.0
  %1348 = vmatprep.subr.mxu0 0.0
  %1349 = vmatpush1.msra.mxu0 %v365
  %1350 = vmatprep.subr.mxu0 0.0
  %1351 = vmatpush1.msra.mxu0 %v364
  %1352 = vmatprep.subr.mxu0 0.0
  %1353 = vmatpush1.msra.mxu0 %v363
  %1354 = vmatprep.subr.mxu0 0.0
  %1355 = vmatpush1.msra.mxu0 %v362
  %1356 = vmatprep.subr.mxu0 0.0
  %1357 = vmatpush2.msra.mxu0 0.0
  %1358 = vmatprep.subr.mxu0 0.0
  %1359 = vmatpush2.msra.mxu0 0.0
  %1360 = vmatprep.subr.mxu0 0.0
  %1361 = vmatpush2.msra.mxu0 0.0
  %1362 = vmatprep.subr.mxu0 0.0
  %1363 = vmatpush2.msra.mxu0 0.0
  %1364 = vmatprep.subr.mxu0 0.0
  %1365 = vmatpush2.msra.mxu0 0.0
  %1366 = vmatprep.subr.mxu0 0.0
  %1367 = vmatpush2.msra.mxu0 0.0
  %1368 = vmatprep.subr.mxu0 0.0
  %1369 = vmatpush2.msra.mxu0 0.0
  %1370 = vmatprep.subr.mxu0 0.0
  %1371 = vmatpush2.msra.mxu0 0.0
  %1372 = vmatprep.subr.mxu0 0.0
  %1373 = vmatpush2.msra.mxu0 0.0
  %1374 = vmatprep.subr.mxu0 0.0
  %1375 = vmatpush2.msra.mxu0 0.0
  %1376 = vmatprep.subr.mxu0 0.0
  %1377 = vmatpush2.msra.mxu0 0.0
  %1378 = vmatprep.subr.mxu0 0.0
  %1379 = vmatpush2.msra.mxu0 0.0
  %1380 = vmatprep.subr.mxu0 0.0
  %1381 = vmatpush2.msra.mxu0 0.0
  %1382 = vmatprep.subr.mxu0 0.0
  %1383 = vmatpush2.msra.mxu0 0.0
  %1384 = vmatprep.subr.mxu0 0.0
  %1385 = vmatpush2.msra.mxu0 0.0
  %1386 = vmatprep.subr.mxu0 0.0
  %1387 = vmatpush2.msra.mxu0 0.0
  %1388 = vmatprep.mubr.f32.mxu0 0.0
  %1389 = vmatmul.mubr.f32.gmra.mxu0 %v1322
  %v1390 = vpop.f32.mrf.mxu0
  %v1391 = vadd.f32 0.0, %v1390
  %v1392 = vpop.f32.mrf.mxu0
  %1393 = vdwg.mxu0
  %v1394 = vadd.f32 %v1318, %v1391
  %1395 = vadd.xlane.f32.xlu0 %v1394
  %v1396 = vpop.xlane.xlu0 %1395
  %v1397 = vmul.f32 %v1396, 0.0078125
  %v1398 = vmul.f32 %v1394, %v1394
  %1399 = vadd.xlane.f32.xlu0 %v1398
  %v1400 = vpop.xlane.xlu0 %1399
  %v1401 = vmul.f32 %v1400, 0.0078125
  %v1402 = vmul.f32 %v1397, %v1397
  %v1403 = vsub.f32 %v1401, %v1402
  %v1404 = vsub.f32 %v1394, %v1397
  %v1405 = vadd.f32 %v1403, 1e-06
  %v1406 = vrsqrt.pop %v1405
  %v1407 = vmul.f32 %v1404, %v1406
  %v1408 = vmul.f32 %v1407, %v465
  %v1409 = vadd.f32 %v1408, %v472
  %v1410 = vmul.f32 %v1409, 2.0
  %v1411 = vsel %vm477, %v1409, %v1410
  %v1412 = vxor.u32 %v1411, 2147483648
  %v1413 = vmul.f32 %v1412, 1.442695
  %v1414 = vpow.pop %v1413
  %v1415 = vadd.f32 %v1414, 1.0
  %v1416 = vrcp.pop %v1415
  %v1417 = vmul.f32 1.0, %v1416
  %v1418 = vmul.f32 %v1417, 2.0
  %v1419 = vsub.f32 %v1418, 1.0
  %v1420 = vsel %vm477, %v1417, %v1419
  %v1421 = vmul.f32 %v1420, %v1298
  %1423 = vrot.lane.b32.xlu0 %v1420, 32
  %v1424 = vpop.permute.xlu0 %1423
  %v1426 = vmul.f32 %v1420, %v1424
  %1428 = vrot.lane.b32.xlu0 %v1426, 32
  %v1429 = vpop.permute.xlu0 %1428
  %v1431 = vadd.f32 %v1421, %v1429
  %1433 = vrot.lane.b32.xlu0 %v1431, 32
  %v1434 = vpop.permute.xlu0 %1433
  %v1436 = vmul.f32 %v1420, %v1434
  %s1437 = scalar_lea.vmem %s0, 56
  %v1438 = vld [vmem:[%s1437] sm:$0xff]
  %1440 = vrot.lane.b32.xlu0 %v1438, 64
  %v1441 = vpop.permute.xlu0 %1440
  %v1443 = vadd.f32 %v1436, %v1441
  %1445 = vrot.lane.b32.xlu0 %v1443, 64
  %v1446 = vpop.permute.xlu0 %1445
  %s1448 = scalar_lea.vmem %s10, 56
  %1449 = vst.msk [vmem:[%s1448] sm:$0xff] %vm80, %v1446
  %1451 = vrot.lane.b32.xlu0 %v1436, 64
  %v1452 = vpop.permute.xlu0 %1451
  %1454 = vst.msk [vmem:[#allocation3] sm:$0xff] %vm80, %v1452
  %1455 = vrot.lane.b32.xlu0 %v1431, 96
  %v1456 = vpop.permute.xlu0 %1455
  %1458 = vst.msk [vmem:[#allocation4] sm:$0xff] %vm80, %v1456
  // Predicated region
  $region46: #{decoder_layer_forward.1} parent=0 // pred_check
    _
  $region47: #{decoder_layer_forward.1} parent=0 // pred_check_branch
    %1460 = sbr.rel (0) target = $region49
  $region48: #{decoder_layer_forward.1} parent=0 // pred_region
    _
  $region49: #{decoder_layer_forward.1} parent=0 // pred_fallthru
    _
  // Predicated region
  $region50: #{decoder_layer_forward.1} parent=0 // pred_check
    _
  $region51: #{decoder_layer_forward.1} parent=0 // pred_check_branch
    %1462 = sbr.rel (0) target = $region53
  $region52: #{decoder_layer_forward.1} parent=0 // pred_region
    _
  $region53: #{decoder_layer_forward.1} parent=0 // pred_fallthru
    _

</llo_original>
